<compile_context>
chip_gen: v7x
topology: tpu7x:2x2x1
jax: 0.10.0
libtpu: 0.0.40
codegen_flags: <defaults>
</compile_context>

<pallas_src>
import math

import jax
import jax.numpy as jnp
import numpy as np
from jax.experimental import pallas as pl
from jax.experimental.pallas import tpu as pltpu

BETA = 0.25  # VQ commitment weight (code_loss = codebook + BETA * commitment)


def _sum_all(v):
    """(M, N) -> (1, 1) full-sum via keepdims reductions (Mosaic friendly)."""
    return jnp.sum(jnp.sum(v, axis=1, keepdims=True), axis=0, keepdims=True)


def vqvae_kernel(x_ref, we_ref, cb_ref, wd_ref, dft_ref, aux_ref, out_ref):
    x = x_ref[...]            # (M, D) f32: this program's slice of the flattened batch
    we = we_ref[...]          # (D, H) f32
    e = cb_ref[...]           # (K, H) f32
    aux = aux_ref[...]        # (8, 128) f32: packed 1-row operands

    D = we.shape[0]
    H = we.shape[1]
    K = e.shape[0]

    b_enc = aux[0:1, :H]      # (1, H)
    esq_half = aux[1:2, :K]   # (1, K) = 0.5 * ||e_k||^2 (pre-scaled in wrapper)
    b_dec = aux[2:3, :D]      # (1, D)

    # ---------------- encoder: z = x @ W_enc + b_enc (f32 -> stable VQ argmin) ----------
    z = jnp.dot(x, we, preferred_element_type=jnp.float32) + b_enc            # (M, H)

    # ---------------- vector quantizer ----------------
    # argmin_k ||z - e_k||^2 == argmin_k (0.5*||e_k||^2 - z.e_k)   (||z||^2 dropped)
    zdote = jax.lax.dot_general(z, e, (((1,), (1,)), ((), ())),
                                preferred_element_type=jnp.float32)           # (M, K)
    dist = esq_half - zdote

    # argmin with first-match tie-break via min/where (no argmin primitive).
    dmin = jnp.min(dist, axis=1, keepdims=True)                               # (M, 1)
    iota_f = jax.lax.broadcasted_iota(jnp.int32, dist.shape, 1).astype(jnp.float32)
    first = jnp.min(jnp.where(dist <= dmin, iota_f, float(K)), axis=1, keepdims=True)
    one_hot = (iota_f == first).astype(jnp.float32)                           # (M, K)

    # Codebook lookup as a one-hot matmul (MXU friendly, no dynamic gather).
    zq = jnp.dot(one_hot, e, preferred_element_type=jnp.float32)              # (M, H)

    # code-loss numerator: (codebook + commitment) == (1 + BETA) * sum((zq - z)^2)
    dz = zq - z
    code = (1.0 + BETA) * _sum_all(dz * dz)                                    # (1, 1)

    # ---------------- decoder (bf16 operands, f32 accumulate) ----------------
    x_recon = jnp.dot(zq.astype(jnp.bfloat16), wd_ref[...],
                      preferred_element_type=jnp.float32) + b_dec             # (M, D)

    diff = x_recon - x
    sse = _sum_all(diff * diff)                                                # (1, 1)

    # ---------------- Fourier-loss numerator ----------------
    # |FFT(x) - FFT(x_recon)| == |FFT(diff)| (linearity). One block-diagonal one-sided
    # real-DFT matmul covers every batch element in this block; the conjugate-symmetric
    # half was folded in via row weights when the matrix was built.
    dft = dft_ref[...]                                                         # (2*Fb, M) bf16
    cs = jnp.dot(dft, diff.astype(jnp.bfloat16),
                 preferred_element_type=jnp.float32)                           # (2*Fb, D)
    half = dft.shape[0] // 2
    re = cs[:half, :]
    im = cs[half:, :]
    mag = _sum_all(jnp.sqrt(re * re + im * im))                                # (1, 1)

    # ---------------- lane-dense, write-once output ----------------
    # Row 0, lanes {0,1,2} = sse / fourier-mag / code partial sums for this program.
    sub = jax.lax.broadcasted_iota(jnp.int32, out_ref.shape, 0)
    lane = jax.lax.broadcasted_iota(jnp.int32, out_ref.shape, 1)
    row0 = sub == 0
    out_ref[...] = jnp.where(row0 & (lane == 0), sse,
                   jnp.where(row0 & (lane == 1), mag,
                   jnp.where(row0 & (lane == 2), code, 0.0)))


def _build_rdft_blockdiag(Bh, L, dtype=jnp.bfloat16):
    """Block-diagonal one-sided real-DFT for Bh stacked length-L sequences.

    Rows [0, Bh*F) give Re(X_k), rows [Bh*F, 2*Bh*F) give Im(X_k), with F = L//2 + 1.
    Rows with k not in {0, L/2} are pre-scaled by 2 so the one-sided weighted magnitude
    sum equals the full two-sided sum for a real input (|X_{L-k}| == |X_k|).
    """
    F_ = L // 2 + 1
    k = np.arange(F_, dtype=np.float64)
    n = np.arange(L, dtype=np.float64)
    ang = 2.0 * np.pi * np.outer(k, n) / float(L)
    w = np.where((k == 0) | ((L % 2 == 0) & (k == L // 2)), 1.0, 2.0)[:, None]
    cos_blk = w * np.cos(ang)        # (F, L)
    sin_blk = -(w * np.sin(ang))     # (F, L)
    eye = np.eye(Bh)
    dft = np.concatenate([np.kron(eye, cos_blk), np.kron(eye, sin_blk)], axis=0)
    return jnp.asarray(dft, dtype=dtype), F_


def vqvae_forward(x, params, num_row_blocks=1):
    """Returns (loss, recon_loss1, recon_loss2, code_loss) matching VQVAE.forward.

    num_row_blocks: number of batch slices / grid programs.  Each program writes partial
    sums to its own output tile, so the grid axis is "parallel" (uses both TensorCores on
    v7x; single-TC chips just run the blocks back-to-back).
    """
    we, be, cb, wd, bd = params
    B, L, D = x.shape
    H = we.shape[1]
    K = cb.shape[0]
    G = int(num_row_blocks)
    assert B % G == 0, "num_row_blocks must divide the batch"
    assert max(H, K, D) <= 128, "packed 1-row operands assume H, K, D <= 128"
    Bh = B // G
    BL = B * L
    BLb = Bh * L

    # Packed 1-row operands: one (8,128) tile instead of three tiny DMAs.
    aux = jnp.zeros((8, 128), jnp.float32)
    aux = aux.at[0, :H].set(be.reshape(H).astype(jnp.float32))
    aux = aux.at[1, :K].set(0.5 * jnp.sum(cb.astype(jnp.float32) ** 2, axis=1))
    aux = aux.at[2, :D].set(bd.reshape(D).astype(jnp.float32))

    dft_big, F_ = _build_rdft_blockdiag(Bh, L)   # (2*Bh*F, BLb) bf16

    x_flat = x.reshape(BL, D).astype(jnp.float32)

    out = pl.pallas_call(
        vqvae_kernel,
        out_shape=jax.ShapeDtypeStruct((G * 8, 128), jnp.float32),
        grid_spec=pltpu.PrefetchScalarGridSpec(
            num_scalar_prefetch=0,
            grid=(G,),
            in_specs=[
                pl.BlockSpec((BLb, D), lambda i: (i, 0)),            # x slice for program i
                pl.BlockSpec((D, H), lambda i: (0, 0)),              # encoder weight (f32)
                pl.BlockSpec((K, H), lambda i: (0, 0)),              # VQ codebook (f32)
                pl.BlockSpec((H, D), lambda i: (0, 0)),              # decoder weight (bf16)
                pl.BlockSpec((2 * Bh * F_, BLb), lambda i: (0, 0)),  # block-diag rDFT (bf16)
                pl.BlockSpec((8, 128), lambda i: (0, 0)),            # packed biases / 0.5||e||^2
            ],
            out_specs=pl.BlockSpec((8, 128), lambda i: (i, 0)),      # per-program partials
        ),
        compiler_params=pltpu.CompilerParams(
            dimension_semantics=("parallel",),
        ),
    )(x_flat, we.astype(jnp.float32), cb.astype(jnp.float32),
      wd.astype(jnp.bfloat16), dft_big, aux)

    parts = out.reshape(G, 8, 128)
    sse = jnp.sum(parts[:, 0, 0])
    mag = jnp.sum(parts[:, 0, 1])
    code = jnp.sum(parts[:, 0, 2])

    num_x = float(B * L * D)
    num_z = float(B * L * H)
    recon_loss1 = sse / num_x                            # F.mse_loss(x_recon, x)
    recon_loss2 = (mag / num_x) / math.sqrt(L) * 0.5     # Fourier_Loss / sqrt(L) * 0.5
    code_loss = code / num_z                             # VQ codebook + BETA*commitment
    loss = recon_loss1 + recon_loss2 + code_loss
    return loss, recon_loss1, recon_loss2, code_loss


def ref_forward(x, params):
    """Pure-JAX reference of the same synthetic VQVAE forward (sanity check)."""
    we, be, cb, wd, bd = params
    B, L, D = x.shape
    z = x @ we + be                                                      # (B, L, H)
    d = jnp.sum((z[:, :, None, :] - cb[None, None, :, :]) ** 2, axis=-1)
    idx = jnp.argmin(d, axis=-1)
    zq = cb[idx]                                                         # (B, L, H)
    code_loss = (1.0 + BETA) * jnp.mean((zq - z) ** 2)
    x_recon = zq @ wd + bd
    recon_loss1 = jnp.mean((x_recon - x) ** 2)
    Fx = jnp.fft.fft(x, axis=1)
    Fr = jnp.fft.fft(x_recon, axis=1)
    recon_loss2 = jnp.mean(jnp.abs(Fx - Fr)) / math.sqrt(L) * 0.5
    return recon_loss1 + recon_loss2 + code_loss


if __name__ == "__main__":
    # B=8 so M = B*L = 128: a full MXU tile worth of rows per call (amortizes the fixed
    # pallas_call launch / DMA-setup cost, which dominates at these toy shapes).
    B, L, D, H, K = 8, 16, 8, 32, 64

    key = jax.random.PRNGKey(0)
    ks = jax.random.split(key, 6)
    x = jax.random.normal(ks[0], (B, L, D), dtype=jnp.float32)
    # Deterministic synthetic parameters (encoder Linear(D->H), VQ codebook (K,H),
    # decoder Linear(H->D)); no checkpoint loading.
    w_enc = jax.random.normal(ks[1], (D, H), dtype=jnp.float32) * 0.2
    b_enc = jax.random.normal(ks[2], (1, H), dtype=jnp.float32) * 0.05
    codebook = jax.random.normal(ks[3], (K, H), dtype=jnp.float32) * 0.3
    w_dec = jax.random.normal(ks[4], (H, D), dtype=jnp.float32) * 0.2
    b_dec = jax.random.normal(ks[5], (1, D), dtype=jnp.float32) * 0.05
    params = (w_enc, b_enc, codebook, w_dec, b_dec)

    ref_loss = float(jax.block_until_ready(ref_forward(x, params)))

    # Single-program path (one TensorCore: v5e / v6e default).
    loss1, _, _, _ = jax.block_until_ready(vqvae_forward(x, params, num_row_blocks=1))
    if not np.allclose(float(loss1), ref_loss, rtol=0.15, atol=2e-2):
        raise AssertionError(f"kernel loss (1 block) {float(loss1)} != reference {ref_loss}")

    # Two-program "parallel" path (shards the batch across both TensorCores on v7x).
    loss2, _, _, _ = jax.block_until_ready(vqvae_forward(x, params, num_row_blocks=2))
    if not np.allclose(float(loss2), ref_loss, rtol=0.15, atol=2e-2):
        raise AssertionError(f"kernel loss (2 blocks) {float(loss2)} != reference {ref_loss}")

    # TODO(synk): the original forward's `print(...)` progress line (and its `lr` arg) and
    # the matplotlib-based `test_one_batch` plotting are host-side side effects with no
    # Pallas equivalent and are intentionally omitted.
    print("KERNEL_OK")
</pallas_src>

<mosaic_0001>
module attributes {stable_mosaic.version = 11 : i64} {
  func.func @vqvae_kernel(%arg0: i32, %arg1: memref<128x8xf32, #tpu.memory_space<vmem>>, %arg2: memref<8x32xf32, #tpu.memory_space<vmem>>, %arg3: memref<64x32xf32, #tpu.memory_space<vmem>>, %arg4: memref<32x8xbf16, #tpu.memory_space<vmem>>, %arg5: memref<144x128xbf16, #tpu.memory_space<vmem>>, %arg6: memref<8x128xf32, #tpu.memory_space<vmem>>, %arg7: memref<8x128xf32, #tpu.memory_space<vmem>>) attributes {dimension_semantics = [#tpu.dimension_semantics<parallel>], iteration_bounds = array<i64: 1>, scalar_prefetch = 0 : i64, scratch_operands = 0 : i64, tpu.core_type = #tpu.core_type<tc>, window_params = [{transform_indices = @transform_0, window_bounds = array<i64: 128, 8>}, {pipeline_mode = #tpu.pipeline_mode<synchronous>, transform_indices = @transform_1, window_bounds = array<i64: 8, 32>}, {pipeline_mode = #tpu.pipeline_mode<synchronous>, transform_indices = @transform_2, window_bounds = array<i64: 64, 32>}, {pipeline_mode = #tpu.pipeline_mode<synchronous>, transform_indices = @transform_3, window_bounds = array<i64: 32, 8>}, {pipeline_mode = #tpu.pipeline_mode<synchronous>, transform_indices = @transform_4, window_bounds = array<i64: 144, 128>}, {pipeline_mode = #tpu.pipeline_mode<synchronous>, transform_indices = @transform_5, window_bounds = array<i64: 8, 128>}, {transform_indices = @transform_6, window_bounds = array<i64: 8, 128>}]} {
    %c0 = arith.constant 0 : index
    %c0_0 = arith.constant 0 : index
    %0 = vector.load %arg1[%c0, %c0_0] : memref<128x8xf32, #tpu.memory_space<vmem>>, vector<128x8xf32>
    %c0_1 = arith.constant 0 : index
    %c0_2 = arith.constant 0 : index
    %1 = vector.load %arg2[%c0_1, %c0_2] : memref<8x32xf32, #tpu.memory_space<vmem>>, vector<8x32xf32>
    %c0_3 = arith.constant 0 : index
    %c0_4 = arith.constant 0 : index
    %2 = vector.load %arg3[%c0_3, %c0_4] : memref<64x32xf32, #tpu.memory_space<vmem>>, vector<64x32xf32>
    %c0_5 = arith.constant 0 : index
    %c0_6 = arith.constant 0 : index
    %3 = vector.load %arg6[%c0_5, %c0_6] : memref<8x128xf32, #tpu.memory_space<vmem>>, vector<8x128xf32>
    %4 = vector.extract_strided_slice %3 {offsets = [0, 0], sizes = [1, 32], strides = [1, 1]} : vector<8x128xf32> to vector<1x32xf32>
    %5 = vector.extract_strided_slice %3 {offsets = [1, 0], sizes = [1, 64], strides = [1, 1]} : vector<8x128xf32> to vector<1x64xf32>
    %6 = vector.extract_strided_slice %3 {offsets = [2, 0], sizes = [1, 8], strides = [1, 1]} : vector<8x128xf32> to vector<1x8xf32>
    %cst = arith.constant dense<0.000000e+00> : vector<128x32xf32>
    %7 = tpu.matmul %0, %1, %cst {dimension_numbers = #tpu.dot_dimension_numbers<[1], [0], [0], [1], [0, 0, 1, 1], [], []>} : vector<128x8xf32>, vector<8x32xf32>, vector<128x32xf32> -> vector<128x32xf32>
    %8 = vector.broadcast %4 : vector<1x32xf32> to vector<128x32xf32>
    %9 = arith.addf %7, %8 : vector<128x32xf32>
    %cst_7 = arith.constant dense<0.000000e+00> : vector<128x64xf32>
    %10 = tpu.matmul %9, %2, %cst_7 {dimension_numbers = #tpu.dot_dimension_numbers<[1], [1], [0], [0], [0, 0, 1, 0], [], []>} : vector<128x32xf32>, vector<64x32xf32>, vector<128x64xf32> -> vector<128x64xf32>
    %11 = vector.broadcast %5 : vector<1x64xf32> to vector<128x64xf32>
    %12 = arith.subf %11, %10 : vector<128x64xf32>
    %cst_8 = arith.constant dense<0x7F800000> : vector<128xf32>
    %13 = vector.multi_reduction <minimumf>, %12, %cst_8 [1] : vector<128x64xf32> to vector<128xf32>
    %14 = vector.shape_cast %13 : vector<128xf32> to vector<128x1xf32>
    %15 = tpu.iota {dimensions = array<i32: 1>} : vector<128x64xi32>
    %16 = arith.sitofp %15 : vector<128x64xi32> to vector<128x64xf32>
    %17 = vector.broadcast %14 : vector<128x1xf32> to vector<128x64xf32>
    %18 = arith.cmpf ole, %12, %17 : vector<128x64xf32>
    %cst_9 = arith.constant 6.400000e+01 : f32
    %19 = vector.broadcast %cst_9 : f32 to vector<128x64xf32>
    %20 = arith.select %18, %16, %19 : vector<128x64xi1>, vector<128x64xf32>
    %cst_10 = arith.constant dense<0x7F800000> : vector<128xf32>
    %21 = vector.multi_reduction <minimumf>, %20, %cst_10 [1] : vector<128x64xf32> to vector<128xf32>
    %22 = vector.shape_cast %21 : vector<128xf32> to vector<128x1xf32>
    %23 = vector.broadcast %22 : vector<128x1xf32> to vector<128x64xf32>
    %24 = arith.cmpf oeq, %16, %23 : vector<128x64xf32>
    %25 = arith.extui %24 : vector<128x64xi1> to vector<128x64xi32>
    %26 = arith.sitofp %25 : vector<128x64xi32> to vector<128x64xf32>
    %cst_11 = arith.constant dense<0.000000e+00> : vector<128x32xf32>
    %27 = tpu.matmul %26, %2, %cst_11 {dimension_numbers = #tpu.dot_dimension_numbers<[1], [0], [0], [1], [0, 0, 1, 1], [], []>} : vector<128x64xf32>, vector<64x32xf32>, vector<128x32xf32> -> vector<128x32xf32>
    %28 = arith.subf %27, %9 : vector<128x32xf32>
    %29 = arith.mulf %28, %28 : vector<128x32xf32>
    %cst_12 = arith.constant dense<0.000000e+00> : vector<128xf32>
    %30 = vector.multi_reduction <add>, %29, %cst_12 [1] : vector<128x32xf32> to vector<128xf32>
    %31 = vector.shape_cast %30 : vector<128xf32> to vector<128x1xf32>
    %cst_13 = arith.constant dense<0.000000e+00> : vector<1xf32>
    %32 = vector.multi_reduction <add>, %31, %cst_13 [0] : vector<128x1xf32> to vector<1xf32>
    %33 = vector.shape_cast %32 : vector<1xf32> to vector<1x1xf32>
    %cst_14 = arith.constant 1.250000e+00 : f32
    %34 = vector.broadcast %cst_14 : f32 to vector<1x1xf32>
    %35 = arith.mulf %34, %33 : vector<1x1xf32>
    %36 = arith.truncf %27 : vector<128x32xf32> to vector<128x32xbf16>
    %c0_15 = arith.constant 0 : index
    %c0_16 = arith.constant 0 : index
    %37 = vector.load %arg4[%c0_15, %c0_16] : memref<32x8xbf16, #tpu.memory_space<vmem>>, vector<32x8xbf16>
    %cst_17 = arith.constant dense<0.000000e+00> : vector<128x8xf32>
    %38 = tpu.matmul %36, %37, %cst_17 {dimension_numbers = #tpu.dot_dimension_numbers<[1], [0], [0], [1], [0, 0, 1, 1], [], []>} : vector<128x32xbf16>, vector<32x8xbf16>, vector<128x8xf32> -> vector<128x8xf32>
    %39 = vector.broadcast %6 : vector<1x8xf32> to vector<128x8xf32>
    %40 = arith.addf %38, %39 : vector<128x8xf32>
    %41 = arith.subf %40, %0 : vector<128x8xf32>
    %42 = arith.mulf %41, %41 : vector<128x8xf32>
    %cst_18 = arith.constant dense<0.000000e+00> : vector<128xf32>
    %43 = vector.multi_reduction <add>, %42, %cst_18 [1] : vector<128x8xf32> to vector<128xf32>
    %44 = vector.shape_cast %43 : vector<128xf32> to vector<128x1xf32>
    %cst_19 = arith.constant dense<0.000000e+00> : vector<1xf32>
    %45 = vector.multi_reduction <add>, %44, %cst_19 [0] : vector<128x1xf32> to vector<1xf32>
    %46 = vector.shape_cast %45 : vector<1xf32> to vector<1x1xf32>
    %c0_20 = arith.constant 0 : index
    %c0_21 = arith.constant 0 : index
    %47 = vector.load %arg5[%c0_20, %c0_21] : memref<144x128xbf16, #tpu.memory_space<vmem>>, vector<144x128xbf16>
    %48 = arith.truncf %41 : vector<128x8xf32> to vector<128x8xbf16>
    %cst_22 = arith.constant dense<0.000000e+00> : vector<144x8xf32>
    %49 = tpu.matmul %47, %48, %cst_22 {dimension_numbers = #tpu.dot_dimension_numbers<[1], [0], [0], [1], [0, 0, 1, 1], [], []>} : vector<144x128xbf16>, vector<128x8xbf16>, vector<144x8xf32> -> vector<144x8xf32>
    %50 = vector.extract_strided_slice %49 {offsets = [0, 0], sizes = [72, 8], strides = [1, 1]} : vector<144x8xf32> to vector<72x8xf32>
    %51 = vector.extract_strided_slice %49 {offsets = [72, 0], sizes = [72, 8], strides = [1, 1]} : vector<144x8xf32> to vector<72x8xf32>
    %52 = arith.mulf %50, %50 : vector<72x8xf32>
    %53 = arith.mulf %51, %51 : vector<72x8xf32>
    %54 = arith.addf %52, %53 : vector<72x8xf32>
    %55 = math.sqrt %54 : vector<72x8xf32>
    %cst_23 = arith.constant dense<0.000000e+00> : vector<72xf32>
    %56 = vector.multi_reduction <add>, %55, %cst_23 [1] : vector<72x8xf32> to vector<72xf32>
    %57 = vector.shape_cast %56 : vector<72xf32> to vector<72x1xf32>
    %cst_24 = arith.constant dense<0.000000e+00> : vector<1xf32>
    %58 = vector.multi_reduction <add>, %57, %cst_24 [0] : vector<72x1xf32> to vector<1xf32>
    %59 = vector.shape_cast %58 : vector<1xf32> to vector<1x1xf32>
    %60 = tpu.iota {dimensions = array<i32: 0>} : vector<8x128xi32>
    %61 = tpu.iota {dimensions = array<i32: 1>} : vector<8x128xi32>
    %c0_i32 = arith.constant 0 : i32
    %62 = vector.broadcast %c0_i32 : i32 to vector<8x128xi32>
    %63 = arith.cmpi eq, %60, %62 : vector<8x128xi32>
    %c0_i32_25 = arith.constant 0 : i32
    %64 = vector.broadcast %c0_i32_25 : i32 to vector<8x128xi32>
    %65 = arith.cmpi eq, %61, %64 : vector<8x128xi32>
    %66 = arith.andi %63, %65 : vector<8x128xi1>
    %c1_i32 = arith.constant 1 : i32
    %67 = vector.broadcast %c1_i32 : i32 to vector<8x128xi32>
    %68 = arith.cmpi eq, %61, %67 : vector<8x128xi32>
    %69 = arith.andi %63, %68 : vector<8x128xi1>
    %c2_i32 = arith.constant 2 : i32
    %70 = vector.broadcast %c2_i32 : i32 to vector<8x128xi32>
    %71 = arith.cmpi eq, %61, %70 : vector<8x128xi32>
    %72 = arith.andi %63, %71 : vector<8x128xi1>
    %cst_26 = arith.constant 0.000000e+00 : f32
    %73 = vector.shape_cast %35 : vector<1x1xf32> to vector<1x1xf32>
    %74 = vector.broadcast %73 : vector<1x1xf32> to vector<8x128xf32>
    %75 = vector.broadcast %cst_26 : f32 to vector<8x128xf32>
    %76 = arith.select %72, %74, %75 : vector<8x128xi1>, vector<8x128xf32>
    %77 = vector.shape_cast %59 : vector<1x1xf32> to vector<1x1xf32>
    %78 = vector.broadcast %77 : vector<1x1xf32> to vector<8x128xf32>
    %79 = arith.select %69, %78, %76 : vector<8x128xi1>, vector<8x128xf32>
    %80 = vector.shape_cast %46 : vector<1x1xf32> to vector<1x1xf32>
    %81 = vector.broadcast %80 : vector<1x1xf32> to vector<8x128xf32>
    %82 = arith.select %66, %81, %79 : vector<8x128xi1>, vector<8x128xf32>
    %c0_27 = arith.constant 0 : index
    %c0_28 = arith.constant 0 : index
    %83 = vector.load %arg7[%c0_27, %c0_28] : memref<8x128xf32, #tpu.memory_space<vmem>>, vector<8x128xf32>
    tpu.vector_store %arg7[%c0_27, %c0_28], %82 {strides = array<i32>} : memref<8x128xf32, #tpu.memory_space<vmem>>, vector<8x128xf32>,
    return
  }
  func.func @transform_0(%arg0: i32) -> (i32, i32) {
    %c0_i32 = arith.constant 0 : i32
    %c0_i32_0 = arith.constant 0 : i32
    return %arg0, %c0_i32 : i32, i32
  }
  func.func @transform_1(%arg0: i32) -> (i32, i32) {
    %c0_i32 = arith.constant 0 : i32
    %c0_i32_0 = arith.constant 0 : i32
    %c0_i32_1 = arith.constant 0 : i32
    return %c0_i32, %c0_i32_0 : i32, i32
  }
  func.func @transform_2(%arg0: i32) -> (i32, i32) {
    %c0_i32 = arith.constant 0 : i32
    %c0_i32_0 = arith.constant 0 : i32
    %c0_i32_1 = arith.constant 0 : i32
    return %c0_i32, %c0_i32_0 : i32, i32
  }
  func.func @transform_3(%arg0: i32) -> (i32, i32) {
    %c0_i32 = arith.constant 0 : i32
    %c0_i32_0 = arith.constant 0 : i32
    %c0_i32_1 = arith.constant 0 : i32
    return %c0_i32, %c0_i32_0 : i32, i32
  }
  func.func @transform_4(%arg0: i32) -> (i32, i32) {
    %c0_i32 = arith.constant 0 : i32
    %c0_i32_0 = arith.constant 0 : i32
    %c0_i32_1 = arith.constant 0 : i32
    return %c0_i32, %c0_i32_0 : i32, i32
  }
  func.func @transform_5(%arg0: i32) -> (i32, i32) {
    %c0_i32 = arith.constant 0 : i32
    %c0_i32_0 = arith.constant 0 : i32
    %c0_i32_1 = arith.constant 0 : i32
    return %c0_i32, %c0_i32_0 : i32, i32
  }
  func.func @transform_6(%arg0: i32) -> (i32, i32) {
    %c0_i32 = arith.constant 0 : i32
    %c0_i32_0 = arith.constant 0 : i32
    return %arg0, %c0_i32 : i32, i32
  }
}

</mosaic_0001>

<llo_original>
// kernel: tpu_custom_call.1
$region0: #{tpu_custom_call.1}
  #allocation0 [shape = 'u32[]', space=smem, size = 0x4, offset = 0x4, fixed_abs, tag = 'smem constant byte address 0x4 - core index']
  #allocation1 [shape = 'u32[144,128]{1,0:T(1,128)}', space=vmem, size = 0x12000, scoped, tag = 'internal scratch']
  %s0 = inlined_call_operand.vmem [shape: f32[128,8], index: 0, kind: input, shape index: {}]
  %s1 = inlined_call_operand.vmem [shape: f32[8,32], index: 1, kind: input, shape index: {}]
  %s2 = inlined_call_operand.vmem [shape: f32[64,32], index: 2, kind: input, shape index: {}]
  %s3 = inlined_call_operand.vmem [shape: bf16[32,8], index: 3, kind: input, shape index: {}]
  %s4 = inlined_call_operand.vmem [shape: bf16[144,128], index: 4, kind: input, shape index: {}]
  %s5 = inlined_call_operand.vmem [shape: f32[8,128], index: 5, kind: input, shape index: {}]
  %s6 = inlined_call_operand.hbm [shape: f32[8,128], index: 6, kind: output, shape index: {}]
  %s7 = sld [smem:[#allocation0]]
  $region34: #{tpu_custom_call.1} parent=0
    _
  %s9 = ssub.s32 1, %s7
  %s10 = scalar_select 0, %s9, %s7
  $region1: #{tpu_custom_call.1} parent=0
    #allocation2 [shape = 'u8[4096]{0}', space=vmem, size = 0x1000, scoped, tag = 'output window, operand 0, single buffered']
    #allocation3 [shape = 's32[1]{0}', space=sflag, size = 0x4, scoped, tag = 'scoped memory for tpu_custom_call.1']
    %11 = vsyncpa [#allocation3], 0
    // Predicated region
    $region2: #{tpu_custom_call.1} parent=1 // pred_check
      _
    $region3: #{tpu_custom_call.1} parent=1 // pred_check_branch
      %13 = sbr.rel (0) target = $region5
    $region4: #{tpu_custom_call.1} parent=1 // pred_region
      _
    $region5: #{tpu_custom_call.1} parent=1 // pred_fallthru
      _
    // Predicated region
    $region6: #{tpu_custom_call.1} parent=1 // pred_check
      _
    $region7: #{tpu_custom_call.1} parent=1 // pred_check_branch
      %15 = sbr.rel (0) target = $region9
    $region8: #{tpu_custom_call.1} parent=1 // pred_region
      _
    $region9: #{tpu_custom_call.1} parent=1 // pred_fallthru
      _
    // Predicated region
    $region10: #{tpu_custom_call.1} parent=1 // pred_check
      _
    $region11: #{tpu_custom_call.1} parent=1 // pred_check_branch
      %17 = sbr.rel (0) target = $region13
    $region12: #{tpu_custom_call.1} parent=1 // pred_region
      _
    $region13: #{tpu_custom_call.1} parent=1 // pred_fallthru
      _
    // Predicated region
    $region14: #{tpu_custom_call.1} parent=1 // pred_check
      _
    $region15: #{tpu_custom_call.1} parent=1 // pred_check_branch
      %19 = sbr.rel (0) target = $region17
    $region16: #{tpu_custom_call.1} parent=1 // pred_region
      _
    $region17: #{tpu_custom_call.1} parent=1 // pred_fallthru
      _
    // Predicated region
    $region18: #{tpu_custom_call.1} parent=1 // pred_check
      _
    $region19: #{tpu_custom_call.1} parent=1 // pred_check_branch
      %21 = sbr.rel (0) target = $region21
    $region20: #{tpu_custom_call.1} parent=1 // pred_region
      _
    $region21: #{tpu_custom_call.1} parent=1 // pred_fallthru
      _
    // Predicated region
    $region22: #{tpu_custom_call.1} parent=1 // pred_check
      _
    $region23: #{tpu_custom_call.1} parent=1 // pred_check_branch
      %23 = sbr.rel (0) target = $region25
    $region24: #{tpu_custom_call.1} parent=1 // pred_region
      _
    $region25: #{tpu_custom_call.1} parent=1 // pred_fallthru
      _
    %v25 = vld [vmem:[%s0] sm:$0xff]
    %v26 = vld [vmem:[%s0 + $0x8] sm:$0xff]
    %v27 = vld [vmem:[%s0 + $0x10] sm:$0xff]
    %v28 = vld [vmem:[%s0 + $0x18] sm:$0xff]
    %v29 = vld [vmem:[%s0 + $0x20] sm:$0xff]
    %v30 = vld [vmem:[%s0 + $0x28] sm:$0xff]
    %v31 = vld [vmem:[%s0 + $0x30] sm:$0xff]
    %v32 = vld [vmem:[%s0 + $0x38] sm:$0xff]
    %v33 = vld [vmem:[%s0 + $0x40] sm:$0xff]
    %v34 = vld [vmem:[%s0 + $0x48] sm:$0xff]
    %v35 = vld [vmem:[%s0 + $0x50] sm:$0xff]
    %v36 = vld [vmem:[%s0 + $0x58] sm:$0xff]
    %v37 = vld [vmem:[%s0 + $0x60] sm:$0xff]
    %v38 = vld [vmem:[%s0 + $0x68] sm:$0xff]
    %v39 = vld [vmem:[%s0 + $0x70] sm:$0xff]
    %v40 = vld [vmem:[%s0 + $0x78] sm:$0xff]
    %v41 = vld [vmem:[%s1] sm:$0xff]
    %v42 = vld [vmem:[%s2] sm:$0xff]
    %v43 = vld [vmem:[%s2 + $0x8] sm:$0xff]
    %v44 = vld [vmem:[%s2 + $0x10] sm:$0xff]
    %v45 = vld [vmem:[%s2 + $0x18] sm:$0xff]
    %v46 = vld [vmem:[%s2 + $0x20] sm:$0xff]
    %v47 = vld [vmem:[%s2 + $0x28] sm:$0xff]
    %v48 = vld [vmem:[%s2 + $0x30] sm:$0xff]
    %v49 = vld [vmem:[%s2 + $0x38] sm:$0xff]
    %v50 = vld [vmem:[%s5] sm:$0xff]
    %v51 = vlaneseq
    %v52 = vshrl.u32 %v51, 7
    %v53 = vsub.s32 0, %v52
    %v54 = vrot.slane %v50, %v53
    %vm55 = vcmask 64512
    %v57 = vsel %vm55, %v25, 0
    %v60 = vsel %vm55, %v26, 0
    %v63 = vsel %vm55, %v27, 0
    %v66 = vsel %vm55, %v28, 0
    %v69 = vsel %vm55, %v29, 0
    %v72 = vsel %vm55, %v30, 0
    %v75 = vsel %vm55, %v31, 0
    %v78 = vsel %vm55, %v32, 0
    %v81 = vsel %vm55, %v33, 0
    %v84 = vsel %vm55, %v34, 0
    %v87 = vsel %vm55, %v35, 0
    %v90 = vsel %vm55, %v36, 0
    %v93 = vsel %vm55, %v37, 0
    %v96 = vsel %vm55, %v38, 0
    %v99 = vsel %vm55, %v39, 0
    %v102 = vsel %vm55, %v40, 0
    %104 = vmatprep.subr.mxu0 0.0
    %105 = vmatpush1.msra.mxu0 %v41
    %106 = vmatprep.subr.mxu0 0.0
    %107 = vmatpush1.msra.mxu0 0.0
    %108 = vmatprep.subr.mxu0 0.0
    %109 = vmatpush1.msra.mxu0 0.0
    %110 = vmatprep.subr.mxu0 0.0
    %111 = vmatpush1.msra.mxu0 0.0
    %112 = vmatprep.subr.mxu0 0.0
    %113 = vmatpush1.msra.mxu0 0.0
    %114 = vmatprep.subr.mxu0 0.0
    %115 = vmatpush1.msra.mxu0 0.0
    %116 = vmatprep.subr.mxu0 0.0
    %117 = vmatpush1.msra.mxu0 0.0
    %118 = vmatprep.subr.mxu0 0.0
    %119 = vmatpush1.msra.mxu0 0.0
    %120 = vmatprep.subr.mxu0 0.0
    %121 = vmatpush1.msra.mxu0 0.0
    %122 = vmatprep.subr.mxu0 0.0
    %123 = vmatpush1.msra.mxu0 0.0
    %124 = vmatprep.subr.mxu0 0.0
    %125 = vmatpush1.msra.mxu0 0.0
    %126 = vmatprep.subr.mxu0 0.0
    %127 = vmatpush1.msra.mxu0 0.0
    %128 = vmatprep.subr.mxu0 0.0
    %129 = vmatpush1.msra.mxu0 0.0
    %130 = vmatprep.subr.mxu0 0.0
    %131 = vmatpush1.msra.mxu0 0.0
    %132 = vmatprep.subr.mxu0 0.0
    %133 = vmatpush1.msra.mxu0 0.0
    %134 = vmatprep.subr.mxu0 0.0
    %135 = vmatpush1.msra.mxu0 0.0
    %136 = vmatprep.subr.mxu0 0.0
    %137 = vmatpush1.msra.mxu0 0.0
    %138 = vmatprep.subr.mxu0 0.0
    %139 = vmatpush1.msra.mxu0 0.0
    %140 = vmatprep.subr.mxu0 0.0
    %141 = vmatpush1.msra.mxu0 0.0
    %142 = vmatprep.subr.mxu0 0.0
    %143 = vmatpush1.msra.mxu0 0.0
    %144 = vmatprep.subr.mxu0 0.0
    %145 = vmatpush1.msra.mxu0 0.0
    %146 = vmatprep.subr.mxu0 0.0
    %147 = vmatpush1.msra.mxu0 0.0
    %148 = vmatprep.subr.mxu0 0.0
    %149 = vmatpush1.msra.mxu0 0.0
    %150 = vmatprep.subr.mxu0 0.0
    %151 = vmatpush1.msra.mxu0 0.0
    %152 = vmatprep.subr.mxu0 0.0
    %153 = vmatpush1.msra.mxu0 0.0
    %154 = vmatprep.subr.mxu0 0.0
    %155 = vmatpush1.msra.mxu0 0.0
    %156 = vmatprep.subr.mxu0 0.0
    %157 = vmatpush1.msra.mxu0 0.0
    %158 = vmatprep.subr.mxu0 0.0
    %159 = vmatpush1.msra.mxu0 0.0
    %160 = vmatprep.subr.mxu0 0.0
    %161 = vmatpush1.msra.mxu0 0.0
    %162 = vmatprep.subr.mxu0 0.0
    %163 = vmatpush1.msra.mxu0 0.0
    %164 = vmatprep.subr.mxu0 0.0
    %165 = vmatpush1.msra.mxu0 0.0
    %166 = vmatprep.subr.mxu0 0.0
    %167 = vmatpush1.msra.mxu0 0.0
    %168 = vmatprep.mubr.f32.mxu0 0.0
    %169 = vmatmul.mubr.f32.gmra.mrb[0].mxu0 %v57
    %v170 = vpop.f32.mrb[0].mxu0
    %v171 = vadd.f32 %v54, %v170
    %v172 = vpop.f32.mrb[0].mxu0
    %173 = vmatprep.mubr.f32.mxu0 0.0
    %174 = vmatmul.mubr.f32.gmra.mrb[0].mxu0 %v60
    %v175 = vpop.f32.mrb[0].mxu0
    %v176 = vadd.f32 %v54, %v175
    %v177 = vpop.f32.mrb[0].mxu0
    %178 = vmatprep.mubr.f32.mxu0 0.0
    %179 = vmatmul.mubr.f32.gmra.mrb[0].mxu0 %v63
    %v180 = vpop.f32.mrb[0].mxu0
    %v181 = vadd.f32 %v54, %v180
    %v182 = vpop.f32.mrb[0].mxu0
    %183 = vmatprep.mubr.f32.mxu0 0.0
    %184 = vmatmul.mubr.f32.gmra.mrb[0].mxu0 %v66
    %v185 = vpop.f32.mrb[0].mxu0
    %v186 = vadd.f32 %v54, %v185
    %v187 = vpop.f32.mrb[0].mxu0
    %188 = vmatprep.mubr.f32.mxu0 0.0
    %189 = vmatmul.mubr.f32.gmra.mrb[0].mxu0 %v69
    %v190 = vpop.f32.mrb[0].mxu0
    %v191 = vadd.f32 %v54, %v190
    %v192 = vpop.f32.mrb[0].mxu0
    %193 = vmatprep.mubr.f32.mxu0 0.0
    %194 = vmatmul.mubr.f32.gmra.mrb[0].mxu0 %v72
    %v195 = vpop.f32.mrb[0].mxu0
    %v196 = vadd.f32 %v54, %v195
    %v197 = vpop.f32.mrb[0].mxu0
    %198 = vmatprep.mubr.f32.mxu0 0.0
    %199 = vmatmul.mubr.f32.gmra.mrb[0].mxu0 %v75
    %v200 = vpop.f32.mrb[0].mxu0
    %v201 = vadd.f32 %v54, %v200
    %v202 = vpop.f32.mrb[0].mxu0
    %203 = vmatprep.mubr.f32.mxu0 0.0
    %204 = vmatmul.mubr.f32.gmra.mrb[0].mxu0 %v78
    %v205 = vpop.f32.mrb[0].mxu0
    %v206 = vadd.f32 %v54, %v205
    %v207 = vpop.f32.mrb[0].mxu0
    %208 = vmatprep.mubr.f32.mxu0 0.0
    %209 = vmatmul.mubr.f32.gmra.mrb[0].mxu0 %v81
    %v210 = vpop.f32.mrb[0].mxu0
    %v211 = vadd.f32 %v54, %v210
    %v212 = vpop.f32.mrb[0].mxu0
    %213 = vmatprep.mubr.f32.mxu0 0.0
    %214 = vmatmul.mubr.f32.gmra.mrb[0].mxu0 %v84
    %v215 = vpop.f32.mrb[0].mxu0
    %v216 = vadd.f32 %v54, %v215
    %v217 = vpop.f32.mrb[0].mxu0
    %218 = vmatprep.mubr.f32.mxu0 0.0
    %219 = vmatmul.mubr.f32.gmra.mrb[0].mxu0 %v87
    %v220 = vpop.f32.mrb[0].mxu0
    %v221 = vadd.f32 %v54, %v220
    %v222 = vpop.f32.mrb[0].mxu0
    %223 = vmatprep.mubr.f32.mxu0 0.0
    %224 = vmatmul.mubr.f32.gmra.mrb[0].mxu0 %v90
    %v225 = vpop.f32.mrb[0].mxu0
    %v226 = vadd.f32 %v54, %v225
    %v227 = vpop.f32.mrb[0].mxu0
    %228 = vmatprep.mubr.f32.mxu0 0.0
    %229 = vmatmul.mubr.f32.gmra.mrb[0].mxu0 %v93
    %v230 = vpop.f32.mrb[0].mxu0
    %v231 = vadd.f32 %v54, %v230
    %v232 = vpop.f32.mrb[0].mxu0
    %233 = vmatprep.mubr.f32.mxu0 0.0
    %234 = vmatmul.mubr.f32.gmra.mrb[0].mxu0 %v96
    %v235 = vpop.f32.mrb[0].mxu0
    %v236 = vadd.f32 %v54, %v235
    %v237 = vpop.f32.mrb[0].mxu0
    %238 = vmatprep.mubr.f32.mxu0 0.0
    %239 = vmatmul.mubr.f32.gmra.mrb[0].mxu0 %v99
    %v240 = vpop.f32.mrb[0].mxu0
    %v241 = vadd.f32 %v54, %v240
    %v242 = vpop.f32.mrb[0].mxu0
    %243 = vmatprep.mubr.f32.mxu0 0.0
    %244 = vmatmul.mubr.f32.gmra.mrb[0].mxu0 %v102
    %v245 = vpop.f32.mrb[0].mxu0
    %v246 = vadd.f32 %v54, %v245
    %v247 = vpop.f32.mrb[0].mxu0
    %248 = vdwg.mxu0
    %vm249 = vcmask 261120
    %v251 = vsel %vm249, %v171, 0
    %v254 = vsel %vm249, %v176, 0
    %v257 = vsel %vm249, %v181, 0
    %v260 = vsel %vm249, %v186, 0
    %v263 = vsel %vm249, %v191, 0
    %v266 = vsel %vm249, %v196, 0
    %v269 = vsel %vm249, %v201, 0
    %v272 = vsel %vm249, %v206, 0
    %v275 = vsel %vm249, %v211, 0
    %v278 = vsel %vm249, %v216, 0
    %v281 = vsel %vm249, %v221, 0
    %v284 = vsel %vm249, %v226, 0
    %v287 = vsel %vm249, %v231, 0
    %v290 = vsel %vm249, %v236, 0
    %v293 = vsel %vm249, %v241, 0
    %v296 = vsel %vm249, %v246, 0
    %v299 = vsel %vm249, %v42, 0
    %v302 = vsel %vm249, %v43, 0
    %v305 = vsel %vm249, %v44, 0
    %v308 = vsel %vm249, %v45, 0
    %v311 = vsel %vm249, %v46, 0
    %v314 = vsel %vm249, %v47, 0
    %v317 = vsel %vm249, %v48, 0
    %v320 = vsel %vm249, %v49, 0
    %322 = vmatprep.subr.mxu0 0.0
    %323 = vmatpush1.xpose.msra.mxu0 %v299
    %324 = vmatprep.subr.mxu0 0.0
    %325 = vmatpush1.xpose.msra.mxu0 %v302
    %326 = vmatprep.subr.mxu0 0.0
    %327 = vmatpush1.xpose.msra.mxu0 %v305
    %328 = vmatprep.subr.mxu0 0.0
    %329 = vmatpush1.xpose.msra.mxu0 %v308
    %330 = vmatprep.subr.mxu0 0.0
    %331 = vmatpush1.xpose.msra.mxu0 %v311
    %332 = vmatprep.subr.mxu0 0.0
    %333 = vmatpush1.xpose.msra.mxu0 %v314
    %334 = vmatprep.subr.mxu0 0.0
    %335 = vmatpush1.xpose.msra.mxu0 %v317
    %336 = vmatprep.subr.mxu0 0.0
    %337 = vmatpush1.xpose.msra.mxu0 %v320
    %338 = vmatprep.subr.mxu0 0.0
    %339 = vmatpush1.xpose.msra.mxu0 0.0
    %340 = vmatprep.subr.mxu0 0.0
    %341 = vmatpush1.xpose.msra.mxu0 0.0
    %342 = vmatprep.subr.mxu0 0.0
    %343 = vmatpush1.xpose.msra.mxu0 0.0
    %344 = vmatprep.subr.mxu0 0.0
    %345 = vmatpush1.xpose.msra.mxu0 0.0
    %346 = vmatprep.subr.mxu0 0.0
    %347 = vmatpush1.xpose.msra.mxu0 0.0
    %348 = vmatprep.subr.mxu0 0.0
    %349 = vmatpush1.xpose.msra.mxu0 0.0
    %350 = vmatprep.subr.mxu0 0.0
    %351 = vmatpush1.xpose.msra.mxu0 0.0
    %352 = vmatprep.subr.mxu0 0.0
    %353 = vmatpush1.xpose.msra.mxu0 0.0
    %354 = vmatprep.subr.mxu0 0.0
    %355 = vmatpush1.xpose.msra.mxu0 0.0
    %356 = vmatprep.subr.mxu0 0.0
    %357 = vmatpush1.xpose.msra.mxu0 0.0
    %358 = vmatprep.subr.mxu0 0.0
    %359 = vmatpush1.xpose.msra.mxu0 0.0
    %360 = vmatprep.subr.mxu0 0.0
    %361 = vmatpush1.xpose.msra.mxu0 0.0
    %362 = vmatprep.subr.mxu0 0.0
    %363 = vmatpush1.xpose.msra.mxu0 0.0
    %364 = vmatprep.subr.mxu0 0.0
    %365 = vmatpush1.xpose.msra.mxu0 0.0
    %366 = vmatprep.subr.mxu0 0.0
    %367 = vmatpush1.xpose.msra.mxu0 0.0
    %368 = vmatprep.subr.mxu0 0.0
    %369 = vmatpush1.xpose.msra.mxu0 0.0
    %370 = vmatprep.subr.mxu0 0.0
    %371 = vmatpush1.xpose.msra.mxu0 0.0
    %372 = vmatprep.subr.mxu0 0.0
    %373 = vmatpush1.xpose.msra.mxu0 0.0
    %374 = vmatprep.subr.mxu0 0.0
    %375 = vmatpush1.xpose.msra.mxu0 0.0
    %376 = vmatprep.subr.mxu0 0.0
    %377 = vmatpush1.xpose.msra.mxu0 0.0
    %378 = vmatprep.subr.mxu0 0.0
    %379 = vmatpush1.xpose.msra.mxu0 0.0
    %380 = vmatprep.subr.mxu0 0.0
    %381 = vmatpush1.xpose.msra.mxu0 0.0
    %382 = vmatprep.subr.mxu0 0.0
    %383 = vmatpush1.xpose.msra.mxu0 0.0
    %384 = vmatprep.subr.mxu0 0.0
    %385 = vmatpush1.xpose.msra.mxu0 0.0
    %386 = vmatprep.mubr.f32.mxu0 0.0
    %387 = vmatmul.mubr.f32.gmra.mrb[0].mxu0 %v251
    %v388 = vpop.f32.mrb[0].mxu0
    %v389 = vadd.f32 0.0, %v388
    %v390 = vpop.f32.mrb[0].mxu0
    %391 = vmatprep.mubr.f32.mxu0 0.0
    %392 = vmatmul.mubr.f32.gmra.mrb[0].mxu0 %v254
    %v393 = vpop.f32.mrb[0].mxu0
    %v394 = vadd.f32 0.0, %v393
    %v395 = vpop.f32.mrb[0].mxu0
    %396 = vmatprep.mubr.f32.mxu0 0.0
    %397 = vmatmul.mubr.f32.gmra.mrb[0].mxu0 %v257
    %v398 = vpop.f32.mrb[0].mxu0
    %v399 = vadd.f32 0.0, %v398
    %v400 = vpop.f32.mrb[0].mxu0
    %401 = vmatprep.mubr.f32.mxu0 0.0
    %402 = vmatmul.mubr.f32.gmra.mrb[0].mxu0 %v260
    %v403 = vpop.f32.mrb[0].mxu0
    %v404 = vadd.f32 0.0, %v403
    %v405 = vpop.f32.mrb[0].mxu0
    %406 = vmatprep.mubr.f32.mxu0 0.0
    %407 = vmatmul.mubr.f32.gmra.mrb[0].mxu0 %v263
    %v408 = vpop.f32.mrb[0].mxu0
    %v409 = vadd.f32 0.0, %v408
    %v410 = vpop.f32.mrb[0].mxu0
    %411 = vmatprep.mubr.f32.mxu0 0.0
    %412 = vmatmul.mubr.f32.gmra.mrb[0].mxu0 %v266
    %v413 = vpop.f32.mrb[0].mxu0
    %v414 = vadd.f32 0.0, %v413
    %v415 = vpop.f32.mrb[0].mxu0
    %416 = vmatprep.mubr.f32.mxu0 0.0
    %417 = vmatmul.mubr.f32.gmra.mrb[0].mxu0 %v269
    %v418 = vpop.f32.mrb[0].mxu0
    %v419 = vadd.f32 0.0, %v418
    %v420 = vpop.f32.mrb[0].mxu0
    %421 = vmatprep.mubr.f32.mxu0 0.0
    %422 = vmatmul.mubr.f32.gmra.mrb[0].mxu0 %v272
    %v423 = vpop.f32.mrb[0].mxu0
    %v424 = vadd.f32 0.0, %v423
    %v425 = vpop.f32.mrb[0].mxu0
    %426 = vmatprep.mubr.f32.mxu0 0.0
    %427 = vmatmul.mubr.f32.gmra.mrb[0].mxu0 %v275
    %v428 = vpop.f32.mrb[0].mxu0
    %v429 = vadd.f32 0.0, %v428
    %v430 = vpop.f32.mrb[0].mxu0
    %431 = vmatprep.mubr.f32.mxu0 0.0
    %432 = vmatmul.mubr.f32.gmra.mrb[0].mxu0 %v278
    %v433 = vpop.f32.mrb[0].mxu0
    %v434 = vadd.f32 0.0, %v433
    %v435 = vpop.f32.mrb[0].mxu0
    %436 = vmatprep.mubr.f32.mxu0 0.0
    %437 = vmatmul.mubr.f32.gmra.mrb[0].mxu0 %v281
    %v438 = vpop.f32.mrb[0].mxu0
    %v439 = vadd.f32 0.0, %v438
    %v440 = vpop.f32.mrb[0].mxu0
    %441 = vmatprep.mubr.f32.mxu0 0.0
    %442 = vmatmul.mubr.f32.gmra.mrb[0].mxu0 %v284
    %v443 = vpop.f32.mrb[0].mxu0
    %v444 = vadd.f32 0.0, %v443
    %v445 = vpop.f32.mrb[0].mxu0
    %446 = vmatprep.mubr.f32.mxu0 0.0
    %447 = vmatmul.mubr.f32.gmra.mrb[0].mxu0 %v287
    %v448 = vpop.f32.mrb[0].mxu0
    %v449 = vadd.f32 0.0, %v448
    %v450 = vpop.f32.mrb[0].mxu0
    %451 = vmatprep.mubr.f32.mxu0 0.0
    %452 = vmatmul.mubr.f32.gmra.mrb[0].mxu0 %v290
    %v453 = vpop.f32.mrb[0].mxu0
    %v454 = vadd.f32 0.0, %v453
    %v455 = vpop.f32.mrb[0].mxu0
    %456 = vmatprep.mubr.f32.mxu0 0.0
    %457 = vmatmul.mubr.f32.gmra.mrb[0].mxu0 %v293
    %v458 = vpop.f32.mrb[0].mxu0
    %v459 = vadd.f32 0.0, %v458
    %v460 = vpop.f32.mrb[0].mxu0
    %461 = vmatprep.mubr.f32.mxu0 0.0
    %462 = vmatmul.mubr.f32.gmra.mrb[0].mxu0 %v296
    %v463 = vpop.f32.mrb[0].mxu0
    %v464 = vadd.f32 0.0, %v463
    %v465 = vpop.f32.mrb[0].mxu0
    %466 = vdwg.mxu0
    %v467 = vlaneseq
    %v468 = vshrl.u32 %v467, 7
    %v469 = vsub.s32 1, %v468
    %v470 = vrot.slane %v50, %v469
    %v471 = vsub.f32 %v470, %v389
    %v472 = vsub.f32 %v470, %v394
    %v473 = vsub.f32 %v470, %v399
    %v474 = vsub.f32 %v470, %v404
    %v475 = vsub.f32 %v470, %v409
    %v476 = vsub.f32 %v470, %v414
    %v477 = vsub.f32 %v470, %v419
    %v478 = vsub.f32 %v470, %v424
    %v479 = vsub.f32 %v470, %v429
    %v480 = vsub.f32 %v470, %v434
    %v481 = vsub.f32 %v470, %v439
    %v482 = vsub.f32 %v470, %v444
    %v483 = vsub.f32 %v470, %v449
    %v484 = vsub.f32 %v470, %v454
    %v485 = vsub.f32 %v470, %v459
    %v486 = vsub.f32 %v470, %v464
    %vm487 = vcmask 523264
    %v488 = vsel %vm487, %v471, inf
    %489 = vmin.xlane.f32.xlu0 %v488
    %v490 = vpop.xlane.xlu0 %489
    %v491 = vsel %vm487, %v472, inf
    %492 = vmin.xlane.f32.xlu0 %v491
    %v493 = vpop.xlane.xlu0 %492
    %v494 = vsel %vm487, %v473, inf
    %495 = vmin.xlane.f32.xlu0 %v494
    %v496 = vpop.xlane.xlu0 %495
    %v497 = vsel %vm487, %v474, inf
    %498 = vmin.xlane.f32.xlu0 %v497
    %v499 = vpop.xlane.xlu0 %498
    %v500 = vsel %vm487, %v475, inf
    %501 = vmin.xlane.f32.xlu0 %v500
    %v502 = vpop.xlane.xlu0 %501
    %v503 = vsel %vm487, %v476, inf
    %504 = vmin.xlane.f32.xlu0 %v503
    %v505 = vpop.xlane.xlu0 %504
    %v506 = vsel %vm487, %v477, inf
    %507 = vmin.xlane.f32.xlu0 %v506
    %v508 = vpop.xlane.xlu0 %507
    %v509 = vsel %vm487, %v478, inf
    %510 = vmin.xlane.f32.xlu0 %v509
    %v511 = vpop.xlane.xlu0 %510
    %v512 = vsel %vm487, %v479, inf
    %513 = vmin.xlane.f32.xlu0 %v512
    %v514 = vpop.xlane.xlu0 %513
    %v515 = vsel %vm487, %v480, inf
    %516 = vmin.xlane.f32.xlu0 %v515
    %v517 = vpop.xlane.xlu0 %516
    %v518 = vsel %vm487, %v481, inf
    %519 = vmin.xlane.f32.xlu0 %v518
    %v520 = vpop.xlane.xlu0 %519
    %v521 = vsel %vm487, %v482, inf
    %522 = vmin.xlane.f32.xlu0 %v521
    %v523 = vpop.xlane.xlu0 %522
    %v524 = vsel %vm487, %v483, inf
    %525 = vmin.xlane.f32.xlu0 %v524
    %v526 = vpop.xlane.xlu0 %525
    %v527 = vsel %vm487, %v484, inf
    %528 = vmin.xlane.f32.xlu0 %v527
    %v529 = vpop.xlane.xlu0 %528
    %v530 = vsel %vm487, %v485, inf
    %531 = vmin.xlane.f32.xlu0 %v530
    %v532 = vpop.xlane.xlu0 %531
    %v533 = vsel %vm487, %v486, inf
    %534 = vmin.xlane.f32.xlu0 %v533
    %v535 = vpop.xlane.xlu0 %534
    %v536 = vlaneseq
    %v537 = vand.u32 %v536, 127
    %v538 = vcvt.s32.f32 %v537
    %vm539 = vcmp.le.f32.partialorder %v471, %v490
    %vm540 = vcmp.le.f32.partialorder %v472, %v493
    %vm541 = vcmp.le.f32.partialorder %v473, %v496
    %vm542 = vcmp.le.f32.partialorder %v474, %v499
    %vm543 = vcmp.le.f32.partialorder %v475, %v502
    %vm544 = vcmp.le.f32.partialorder %v476, %v505
    %vm545 = vcmp.le.f32.partialorder %v477, %v508
    %vm546 = vcmp.le.f32.partialorder %v478, %v511
    %vm547 = vcmp.le.f32.partialorder %v479, %v514
    %vm548 = vcmp.le.f32.partialorder %v480, %v517
    %vm549 = vcmp.le.f32.partialorder %v481, %v520
    %vm550 = vcmp.le.f32.partialorder %v482, %v523
    %vm551 = vcmp.le.f32.partialorder %v483, %v526
    %vm552 = vcmp.le.f32.partialorder %v484, %v529
    %vm553 = vcmp.le.f32.partialorder %v485, %v532
    %vm554 = vcmp.le.f32.partialorder %v486, %v535
    %v555 = vsel %vm539, %v538, 64.0
    %v556 = vsel %vm540, %v538, 64.0
    %v557 = vsel %vm541, %v538, 64.0
    %v558 = vsel %vm542, %v538, 64.0
    %v559 = vsel %vm543, %v538, 64.0
    %v560 = vsel %vm544, %v538, 64.0
    %v561 = vsel %vm545, %v538, 64.0
    %v562 = vsel %vm546, %v538, 64.0
    %v563 = vsel %vm547, %v538, 64.0
    %v564 = vsel %vm548, %v538, 64.0
    %v565 = vsel %vm549, %v538, 64.0
    %v566 = vsel %vm550, %v538, 64.0
    %v567 = vsel %vm551, %v538, 64.0
    %v568 = vsel %vm552, %v538, 64.0
    %v569 = vsel %vm553, %v538, 64.0
    %v570 = vsel %vm554, %v538, 64.0
    %v571 = vsel %vm487, %v555, inf
    %572 = vmin.xlane.f32.xlu0 %v571
    %v573 = vpop.xlane.xlu0 %572
    %v574 = vsel %vm487, %v556, inf
    %575 = vmin.xlane.f32.xlu0 %v574
    %v576 = vpop.xlane.xlu0 %575
    %v577 = vsel %vm487, %v557, inf
    %578 = vmin.xlane.f32.xlu0 %v577
    %v579 = vpop.xlane.xlu0 %578
    %v580 = vsel %vm487, %v558, inf
    %581 = vmin.xlane.f32.xlu0 %v580
    %v582 = vpop.xlane.xlu0 %581
    %v583 = vsel %vm487, %v559, inf
    %584 = vmin.xlane.f32.xlu0 %v583
    %v585 = vpop.xlane.xlu0 %584
    %v586 = vsel %vm487, %v560, inf
    %587 = vmin.xlane.f32.xlu0 %v586
    %v588 = vpop.xlane.xlu0 %587
    %v589 = vsel %vm487, %v561, inf
    %590 = vmin.xlane.f32.xlu0 %v589
    %v591 = vpop.xlane.xlu0 %590
    %v592 = vsel %vm487, %v562, inf
    %593 = vmin.xlane.f32.xlu0 %v592
    %v594 = vpop.xlane.xlu0 %593
    %v595 = vsel %vm487, %v563, inf
    %596 = vmin.xlane.f32.xlu0 %v595
    %v597 = vpop.xlane.xlu0 %596
    %v598 = vsel %vm487, %v564, inf
    %599 = vmin.xlane.f32.xlu0 %v598
    %v600 = vpop.xlane.xlu0 %599
    %v601 = vsel %vm487, %v565, inf
    %602 = vmin.xlane.f32.xlu0 %v601
    %v603 = vpop.xlane.xlu0 %602
    %v604 = vsel %vm487, %v566, inf
    %605 = vmin.xlane.f32.xlu0 %v604
    %v606 = vpop.xlane.xlu0 %605
    %v607 = vsel %vm487, %v567, inf
    %608 = vmin.xlane.f32.xlu0 %v607
    %v609 = vpop.xlane.xlu0 %608
    %v610 = vsel %vm487, %v568, inf
    %611 = vmin.xlane.f32.xlu0 %v610
    %v612 = vpop.xlane.xlu0 %611
    %v613 = vsel %vm487, %v569, inf
    %614 = vmin.xlane.f32.xlu0 %v613
    %v615 = vpop.xlane.xlu0 %614
    %v616 = vsel %vm487, %v570, inf
    %617 = vmin.xlane.f32.xlu0 %v616
    %v618 = vpop.xlane.xlu0 %617
    %vm619 = vcmp.eq.f32.partialorder %v538, %v573
    %vm620 = vcmp.eq.f32.partialorder %v538, %v576
    %vm621 = vcmp.eq.f32.partialorder %v538, %v579
    %vm622 = vcmp.eq.f32.partialorder %v538, %v582
    %vm623 = vcmp.eq.f32.partialorder %v538, %v585
    %vm624 = vcmp.eq.f32.partialorder %v538, %v588
    %vm625 = vcmp.eq.f32.partialorder %v538, %v591
    %vm626 = vcmp.eq.f32.partialorder %v538, %v594
    %vm627 = vcmp.eq.f32.partialorder %v538, %v597
    %vm628 = vcmp.eq.f32.partialorder %v538, %v600
    %vm629 = vcmp.eq.f32.partialorder %v538, %v603
    %vm630 = vcmp.eq.f32.partialorder %v538, %v606
    %vm631 = vcmp.eq.f32.partialorder %v538, %v609
    %vm632 = vcmp.eq.f32.partialorder %v538, %v612
    %vm633 = vcmp.eq.f32.partialorder %v538, %v615
    %vm634 = vcmp.eq.f32.partialorder %v538, %v618
    %v635 = vsel %vm619, 1, 0
    %v636 = vsel %vm620, 1, 0
    %v637 = vsel %vm621, 1, 0
    %v638 = vsel %vm622, 1, 0
    %v639 = vsel %vm623, 1, 0
    %v640 = vsel %vm624, 1, 0
    %v641 = vsel %vm625, 1, 0
    %v642 = vsel %vm626, 1, 0
    %v643 = vsel %vm627, 1, 0
    %v644 = vsel %vm628, 1, 0
    %v645 = vsel %vm629, 1, 0
    %v646 = vsel %vm630, 1, 0
    %v647 = vsel %vm631, 1, 0
    %v648 = vsel %vm632, 1, 0
    %v649 = vsel %vm633, 1, 0
    %v650 = vsel %vm634, 1, 0
    %v651 = vcvt.s32.f32 %v635
    %v652 = vcvt.s32.f32 %v636
    %v653 = vcvt.s32.f32 %v637
    %v654 = vcvt.s32.f32 %v638
    %v655 = vcvt.s32.f32 %v639
    %v656 = vcvt.s32.f32 %v640
    %v657 = vcvt.s32.f32 %v641
    %v658 = vcvt.s32.f32 %v642
    %v659 = vcvt.s32.f32 %v643
    %v660 = vcvt.s32.f32 %v644
    %v661 = vcvt.s32.f32 %v645
    %v662 = vcvt.s32.f32 %v646
    %v663 = vcvt.s32.f32 %v647
    %v664 = vcvt.s32.f32 %v648
    %v665 = vcvt.s32.f32 %v649
    %v666 = vcvt.s32.f32 %v650
    %v668 = vsel %vm487, %v651, 0
    %v671 = vsel %vm487, %v652, 0
    %v674 = vsel %vm487, %v653, 0
    %v677 = vsel %vm487, %v654, 0
    %v680 = vsel %vm487, %v655, 0
    %v683 = vsel %vm487, %v656, 0
    %v686 = vsel %vm487, %v657, 0
    %v689 = vsel %vm487, %v658, 0
    %v692 = vsel %vm487, %v659, 0
    %v695 = vsel %vm487, %v660, 0
    %v698 = vsel %vm487, %v661, 0
    %v701 = vsel %vm487, %v662, 0
    %v704 = vsel %vm487, %v663, 0
    %v707 = vsel %vm487, %v664, 0
    %v710 = vsel %vm487, %v665, 0
    %v713 = vsel %vm487, %v666, 0
    %715 = vmatprep.subr.mxu0 0.0
    %716 = vmatpush1.msra.mxu0 %v42
    %717 = vmatprep.subr.mxu0 0.0
    %718 = vmatpush1.msra.mxu0 %v43
    %719 = vmatprep.subr.mxu0 0.0
    %720 = vmatpush1.msra.mxu0 %v44
    %721 = vmatprep.subr.mxu0 0.0
    %722 = vmatpush1.msra.mxu0 %v45
    %723 = vmatprep.subr.mxu0 0.0
    %724 = vmatpush1.msra.mxu0 %v46
    %725 = vmatprep.subr.mxu0 0.0
    %726 = vmatpush1.msra.mxu0 %v47
    %727 = vmatprep.subr.mxu0 0.0
    %728 = vmatpush1.msra.mxu0 %v48
    %729 = vmatprep.subr.mxu0 0.0
    %730 = vmatpush1.msra.mxu0 %v49
    %731 = vmatprep.subr.mxu0 0.0
    %732 = vmatpush1.msra.mxu0 0.0
    %733 = vmatprep.subr.mxu0 0.0
    %734 = vmatpush1.msra.mxu0 0.0
    %735 = vmatprep.subr.mxu0 0.0
    %736 = vmatpush1.msra.mxu0 0.0
    %737 = vmatprep.subr.mxu0 0.0
    %738 = vmatpush1.msra.mxu0 0.0
    %739 = vmatprep.subr.mxu0 0.0
    %740 = vmatpush1.msra.mxu0 0.0
    %741 = vmatprep.subr.mxu0 0.0
    %742 = vmatpush1.msra.mxu0 0.0
    %743 = vmatprep.subr.mxu0 0.0
    %744 = vmatpush1.msra.mxu0 0.0
    %745 = vmatprep.subr.mxu0 0.0
    %746 = vmatpush1.msra.mxu0 0.0
    %747 = vmatprep.subr.mxu0 0.0
    %748 = vmatpush1.msra.mxu0 0.0
    %749 = vmatprep.subr.mxu0 0.0
    %750 = vmatpush1.msra.mxu0 0.0
    %751 = vmatprep.subr.mxu0 0.0
    %752 = vmatpush1.msra.mxu0 0.0
    %753 = vmatprep.subr.mxu0 0.0
    %754 = vmatpush1.msra.mxu0 0.0
    %755 = vmatprep.subr.mxu0 0.0
    %756 = vmatpush1.msra.mxu0 0.0
    %757 = vmatprep.subr.mxu0 0.0
    %758 = vmatpush1.msra.mxu0 0.0
    %759 = vmatprep.subr.mxu0 0.0
    %760 = vmatpush1.msra.mxu0 0.0
    %761 = vmatprep.subr.mxu0 0.0
    %762 = vmatpush1.msra.mxu0 0.0
    %763 = vmatprep.subr.mxu0 0.0
    %764 = vmatpush1.msra.mxu0 0.0
    %765 = vmatprep.subr.mxu0 0.0
    %766 = vmatpush1.msra.mxu0 0.0
    %767 = vmatprep.subr.mxu0 0.0
    %768 = vmatpush1.msra.mxu0 0.0
    %769 = vmatprep.subr.mxu0 0.0
    %770 = vmatpush1.msra.mxu0 0.0
    %771 = vmatprep.subr.mxu0 0.0
    %772 = vmatpush1.msra.mxu0 0.0
    %773 = vmatprep.subr.mxu0 0.0
    %774 = vmatpush1.msra.mxu0 0.0
    %775 = vmatprep.subr.mxu0 0.0
    %776 = vmatpush1.msra.mxu0 0.0
    %777 = vmatprep.subr.mxu0 0.0
    %778 = vmatpush1.msra.mxu0 0.0
    %779 = vmatprep.mubr.f32.mxu0 0.0
    %780 = vmatmul.mubr.f32.gmra.mrb[0].mxu0 %v668
    %v781 = vpop.f32.mrb[0].mxu0
    %v782 = vadd.f32 0.0, %v781
    %v783 = vpop.f32.mrb[0].mxu0
    %784 = vmatprep.mubr.f32.mxu0 0.0
    %785 = vmatmul.mubr.f32.gmra.mrb[0].mxu0 %v671
    %v786 = vpop.f32.mrb[0].mxu0
    %v787 = vadd.f32 0.0, %v786
    %v788 = vpop.f32.mrb[0].mxu0
    %789 = vmatprep.mubr.f32.mxu0 0.0
    %790 = vmatmul.mubr.f32.gmra.mrb[0].mxu0 %v674
    %v791 = vpop.f32.mrb[0].mxu0
    %v792 = vadd.f32 0.0, %v791
    %v793 = vpop.f32.mrb[0].mxu0
    %794 = vmatprep.mubr.f32.mxu0 0.0
    %795 = vmatmul.mubr.f32.gmra.mrb[0].mxu0 %v677
    %v796 = vpop.f32.mrb[0].mxu0
    %v797 = vadd.f32 0.0, %v796
    %v798 = vpop.f32.mrb[0].mxu0
    %799 = vmatprep.mubr.f32.mxu0 0.0
    %800 = vmatmul.mubr.f32.gmra.mrb[0].mxu0 %v680
    %v801 = vpop.f32.mrb[0].mxu0
    %v802 = vadd.f32 0.0, %v801
    %v803 = vpop.f32.mrb[0].mxu0
    %804 = vmatprep.mubr.f32.mxu0 0.0
    %805 = vmatmul.mubr.f32.gmra.mrb[0].mxu0 %v683
    %v806 = vpop.f32.mrb[0].mxu0
    %v807 = vadd.f32 0.0, %v806
    %v808 = vpop.f32.mrb[0].mxu0
    %809 = vmatprep.mubr.f32.mxu0 0.0
    %810 = vmatmul.mubr.f32.gmra.mrb[0].mxu0 %v686
    %v811 = vpop.f32.mrb[0].mxu0
    %v812 = vadd.f32 0.0, %v811
    %v813 = vpop.f32.mrb[0].mxu0
    %814 = vmatprep.mubr.f32.mxu0 0.0
    %815 = vmatmul.mubr.f32.gmra.mrb[0].mxu0 %v689
    %v816 = vpop.f32.mrb[0].mxu0
    %v817 = vadd.f32 0.0, %v816
    %v818 = vpop.f32.mrb[0].mxu0
    %819 = vmatprep.mubr.f32.mxu0 0.0
    %820 = vmatmul.mubr.f32.gmra.mrb[0].mxu0 %v692
    %v821 = vpop.f32.mrb[0].mxu0
    %v822 = vadd.f32 0.0, %v821
    %v823 = vpop.f32.mrb[0].mxu0
    %824 = vmatprep.mubr.f32.mxu0 0.0
    %825 = vmatmul.mubr.f32.gmra.mrb[0].mxu0 %v695
    %v826 = vpop.f32.mrb[0].mxu0
    %v827 = vadd.f32 0.0, %v826
    %v828 = vpop.f32.mrb[0].mxu0
    %829 = vmatprep.mubr.f32.mxu0 0.0
    %830 = vmatmul.mubr.f32.gmra.mrb[0].mxu0 %v698
    %v831 = vpop.f32.mrb[0].mxu0
    %v832 = vadd.f32 0.0, %v831
    %v833 = vpop.f32.mrb[0].mxu0
    %834 = vmatprep.mubr.f32.mxu0 0.0
    %835 = vmatmul.mubr.f32.gmra.mrb[0].mxu0 %v701
    %v836 = vpop.f32.mrb[0].mxu0
    %v837 = vadd.f32 0.0, %v836
    %v838 = vpop.f32.mrb[0].mxu0
    %839 = vmatprep.mubr.f32.mxu0 0.0
    %840 = vmatmul.mubr.f32.gmra.mrb[0].mxu0 %v704
    %v841 = vpop.f32.mrb[0].mxu0
    %v842 = vadd.f32 0.0, %v841
    %v843 = vpop.f32.mrb[0].mxu0
    %844 = vmatprep.mubr.f32.mxu0 0.0
    %845 = vmatmul.mubr.f32.gmra.mrb[0].mxu0 %v707
    %v846 = vpop.f32.mrb[0].mxu0
    %v847 = vadd.f32 0.0, %v846
    %v848 = vpop.f32.mrb[0].mxu0
    %849 = vmatprep.mubr.f32.mxu0 0.0
    %850 = vmatmul.mubr.f32.gmra.mrb[0].mxu0 %v710
    %v851 = vpop.f32.mrb[0].mxu0
    %v852 = vadd.f32 0.0, %v851
    %v853 = vpop.f32.mrb[0].mxu0
    %854 = vmatprep.mubr.f32.mxu0 0.0
    %855 = vmatmul.mubr.f32.gmra.mrb[0].mxu0 %v713
    %v856 = vpop.f32.mrb[0].mxu0
    %v857 = vadd.f32 0.0, %v856
    %v858 = vpop.f32.mrb[0].mxu0
    %859 = vdwg.mxu0
    %v860 = vsub.f32 %v782, %v171
    %v861 = vsub.f32 %v787, %v176
    %v862 = vsub.f32 %v792, %v181
    %v863 = vsub.f32 %v797, %v186
    %v864 = vsub.f32 %v802, %v191
    %v865 = vsub.f32 %v807, %v196
    %v866 = vsub.f32 %v812, %v201
    %v867 = vsub.f32 %v817, %v206
    %v868 = vsub.f32 %v822, %v211
    %v869 = vsub.f32 %v827, %v216
    %v870 = vsub.f32 %v832, %v221
    %v871 = vsub.f32 %v837, %v226
    %v872 = vsub.f32 %v842, %v231
    %v873 = vsub.f32 %v847, %v236
    %v874 = vsub.f32 %v852, %v241
    %v875 = vsub.f32 %v857, %v246
    %v876 = vmul.f32 %v860, %v860
    %v877 = vmul.f32 %v861, %v861
    %v878 = vmul.f32 %v862, %v862
    %v879 = vmul.f32 %v863, %v863
    %v880 = vmul.f32 %v864, %v864
    %v881 = vmul.f32 %v865, %v865
    %v882 = vmul.f32 %v866, %v866
    %v883 = vmul.f32 %v867, %v867
    %v884 = vmul.f32 %v868, %v868
    %v885 = vmul.f32 %v869, %v869
    %v886 = vmul.f32 %v870, %v870
    %v887 = vmul.f32 %v871, %v871
    %v888 = vmul.f32 %v872, %v872
    %v889 = vmul.f32 %v873, %v873
    %v890 = vmul.f32 %v874, %v874
    %v891 = vmul.f32 %v875, %v875
    %v892 = vsel %vm249, %v876, 0.0
    %893 = vadd.xlane.f32.xlu0 %v892
    %v894 = vpop.xlane.xlu0 %893
    %v895 = vsel %vm249, %v877, 0.0
    %896 = vadd.xlane.f32.xlu0 %v895
    %v897 = vpop.xlane.xlu0 %896
    %v898 = vsel %vm249, %v878, 0.0
    %899 = vadd.xlane.f32.xlu0 %v898
    %v900 = vpop.xlane.xlu0 %899
    %v901 = vsel %vm249, %v879, 0.0
    %902 = vadd.xlane.f32.xlu0 %v901
    %v903 = vpop.xlane.xlu0 %902
    %v904 = vsel %vm249, %v880, 0.0
    %905 = vadd.xlane.f32.xlu0 %v904
    %v906 = vpop.xlane.xlu0 %905
    %v907 = vsel %vm249, %v881, 0.0
    %908 = vadd.xlane.f32.xlu0 %v907
    %v909 = vpop.xlane.xlu0 %908
    %v910 = vsel %vm249, %v882, 0.0
    %911 = vadd.xlane.f32.xlu0 %v910
    %v912 = vpop.xlane.xlu0 %911
    %v913 = vsel %vm249, %v883, 0.0
    %914 = vadd.xlane.f32.xlu0 %v913
    %v915 = vpop.xlane.xlu0 %914
    %v916 = vsel %vm249, %v884, 0.0
    %917 = vadd.xlane.f32.xlu0 %v916
    %v918 = vpop.xlane.xlu0 %917
    %v919 = vsel %vm249, %v885, 0.0
    %920 = vadd.xlane.f32.xlu0 %v919
    %v921 = vpop.xlane.xlu0 %920
    %v922 = vsel %vm249, %v886, 0.0
    %923 = vadd.xlane.f32.xlu0 %v922
    %v924 = vpop.xlane.xlu0 %923
    %v925 = vsel %vm249, %v887, 0.0
    %926 = vadd.xlane.f32.xlu0 %v925
    %v927 = vpop.xlane.xlu0 %926
    %v928 = vsel %vm249, %v888, 0.0
    %929 = vadd.xlane.f32.xlu0 %v928
    %v930 = vpop.xlane.xlu0 %929
    %v931 = vsel %vm249, %v889, 0.0
    %932 = vadd.xlane.f32.xlu0 %v931
    %v933 = vpop.xlane.xlu0 %932
    %v934 = vsel %vm249, %v890, 0.0
    %935 = vadd.xlane.f32.xlu0 %v934
    %v936 = vpop.xlane.xlu0 %935
    %v937 = vsel %vm249, %v891, 0.0
    %938 = vadd.xlane.f32.xlu0 %v937
    %v939 = vpop.xlane.xlu0 %938
    %v940 = vadd.f32 %v894, %v897
    %v941 = vadd.f32 %v940, %v900
    %v942 = vadd.f32 %v941, %v903
    %v943 = vadd.f32 %v942, %v906
    %v944 = vadd.f32 %v943, %v909
    %v945 = vadd.f32 %v944, %v912
    %v946 = vadd.f32 %v945, %v915
    %v947 = vadd.f32 %v946, %v918
    %v948 = vadd.f32 %v947, %v921
    %v949 = vadd.f32 %v948, %v924
    %v950 = vadd.f32 %v949, %v927
    %v951 = vadd.f32 %v950, %v930
    %v952 = vadd.f32 %v951, %v933
    %v953 = vadd.f32 %v952, %v936
    %v954 = vadd.f32 %v953, %v939
    %v955 = vrot.slane %v954, 4
    %v956 = vadd.f32 %v954, %v955
    %v957 = vrot.slane %v956, 2
    %v958 = vadd.f32 %v956, %v957
    %v959 = vrot.slane %v958, 1
    %v960 = vadd.f32 %v958, %v959
    %v961 = vmul.f32 %v960, 1.25
    %v962 = vpack.c.bf16 %v787, %v782
    %v963 = vpack.c.bf16 %v797, %v792
    %v964 = vpack.c.bf16 %v807, %v802
    %v965 = vpack.c.bf16 %v817, %v812
    %v966 = vpack.c.bf16 %v827, %v822
    %v967 = vpack.c.bf16 %v837, %v832
    %v968 = vpack.c.bf16 %v847, %v842
    %v969 = vpack.c.bf16 %v857, %v852
    %v970 = vld [vmem:[%s3] sm:$0xf]
    %v971 = vld [vmem:[%s3 + $0x4] sm:$0xf]
    %v972 = vld [vmem:[%s3 + $0x8] sm:$0xf]
    %v973 = vld [vmem:[%s3 + $0xc] sm:$0xf]
    %v974 = vlaneseq
    %v975 = vshrl.u32 %v974, 7
    %v976 = vsub.s32 2, %v975
    %v977 = vrot.slane %v50, %v976
    %v982 = vunpack.c.l.b16 %v970
    %v983 = vunpack.c.l.b16 %v971
    %v984 = vunpack.c.l.b16 %v972
    %v985 = vunpack.c.l.b16 %v973
    %v986 = vpack.c.b16 %v983, %v982
    %v987 = vpack.c.b16 %v985, %v984
    %v991 = vsel %vm249, %v962, 0
    %v994 = vsel %vm249, %v963, 0
    %v997 = vsel %vm249, %v964, 0
    %v1000 = vsel %vm249, %v965, 0
    %v1003 = vsel %vm249, %v966, 0
    %v1006 = vsel %vm249, %v967, 0
    %v1009 = vsel %vm249, %v968, 0
    %v1012 = vsel %vm249, %v969, 0
    %1014 = vmatprep.subr.bf16.mxu0 0
    %1015 = vmatpush1.bf16.msra.mxu0 %v986
    %1016 = vmatprep.subr.bf16.mxu0 0
    %1017 = vmatpush1.bf16.msra.mxu0 %v987
    %1018 = vmatprep.subr.bf16.mxu0 0
    %1019 = vmatpush1.bf16.msra.mxu0 0
    %1020 = vmatprep.subr.bf16.mxu0 0
    %1021 = vmatpush1.bf16.msra.mxu0 0
    %1022 = vmatprep.subr.bf16.mxu0 0
    %1023 = vmatpush1.bf16.msra.mxu0 0
    %1024 = vmatprep.subr.bf16.mxu0 0
    %1025 = vmatpush1.bf16.msra.mxu0 0
    %1026 = vmatprep.subr.bf16.mxu0 0
    %1027 = vmatpush1.bf16.msra.mxu0 0
    %1028 = vmatprep.subr.bf16.mxu0 0
    %1029 = vmatpush1.bf16.msra.mxu0 0
    %1030 = vmatprep.subr.bf16.mxu0 0
    %1031 = vmatpush1.bf16.msra.mxu0 0
    %1032 = vmatprep.subr.bf16.mxu0 0
    %1033 = vmatpush1.bf16.msra.mxu0 0
    %1034 = vmatprep.subr.bf16.mxu0 0
    %1035 = vmatpush1.bf16.msra.mxu0 0
    %1036 = vmatprep.subr.bf16.mxu0 0
    %1037 = vmatpush1.bf16.msra.mxu0 0
    %1038 = vmatprep.subr.bf16.mxu0 0
    %1039 = vmatpush1.bf16.msra.mxu0 0
    %1040 = vmatprep.subr.bf16.mxu0 0
    %1041 = vmatpush1.bf16.msra.mxu0 0
    %1042 = vmatprep.subr.bf16.mxu0 0
    %1043 = vmatpush1.bf16.msra.mxu0 0
    %1044 = vmatprep.subr.bf16.mxu0 0
    %1045 = vmatpush1.bf16.msra.mxu0 0
    %1046 = vmatprep.mubr.bf16.mxu0 0
    %1047 = vmatmul.mubr.bf16.gmra.mrb[0].mxu0 %v991
    %v1048 = vpop.f32.mrb[0].mxu0
    %v1049 = vadd.f32 %v977, %v1048
    %v1050 = vpop.f32.mrb[0].mxu0
    %v1051 = vpop.f32.mrb[0].mxu0
    %v1052 = vadd.f32 %v977, %v1051
    %v1053 = vpop.f32.mrb[0].mxu0
    %1054 = vmatprep.mubr.bf16.mxu0 0
    %1055 = vmatmul.mubr.bf16.gmra.mrb[0].mxu0 %v994
    %v1056 = vpop.f32.mrb[0].mxu0
    %v1057 = vadd.f32 %v977, %v1056
    %v1058 = vpop.f32.mrb[0].mxu0
    %v1059 = vpop.f32.mrb[0].mxu0
    %v1060 = vadd.f32 %v977, %v1059
    %v1061 = vpop.f32.mrb[0].mxu0
    %1062 = vmatprep.mubr.bf16.mxu0 0
    %1063 = vmatmul.mubr.bf16.gmra.mrb[0].mxu0 %v997
    %v1064 = vpop.f32.mrb[0].mxu0
    %v1065 = vadd.f32 %v977, %v1064
    %v1066 = vpop.f32.mrb[0].mxu0
    %v1067 = vpop.f32.mrb[0].mxu0
    %v1068 = vadd.f32 %v977, %v1067
    %v1069 = vpop.f32.mrb[0].mxu0
    %1070 = vmatprep.mubr.bf16.mxu0 0
    %1071 = vmatmul.mubr.bf16.gmra.mrb[0].mxu0 %v1000
    %v1072 = vpop.f32.mrb[0].mxu0
    %v1073 = vadd.f32 %v977, %v1072
    %v1074 = vpop.f32.mrb[0].mxu0
    %v1075 = vpop.f32.mrb[0].mxu0
    %v1076 = vadd.f32 %v977, %v1075
    %v1077 = vpop.f32.mrb[0].mxu0
    %1078 = vmatprep.mubr.bf16.mxu0 0
    %1079 = vmatmul.mubr.bf16.gmra.mrb[0].mxu0 %v1003
    %v1080 = vpop.f32.mrb[0].mxu0
    %v1081 = vadd.f32 %v977, %v1080
    %v1082 = vpop.f32.mrb[0].mxu0
    %v1083 = vpop.f32.mrb[0].mxu0
    %v1084 = vadd.f32 %v977, %v1083
    %v1085 = vpop.f32.mrb[0].mxu0
    %1086 = vmatprep.mubr.bf16.mxu0 0
    %1087 = vmatmul.mubr.bf16.gmra.mrb[0].mxu0 %v1006
    %v1088 = vpop.f32.mrb[0].mxu0
    %v1089 = vadd.f32 %v977, %v1088
    %v1090 = vpop.f32.mrb[0].mxu0
    %v1091 = vpop.f32.mrb[0].mxu0
    %v1092 = vadd.f32 %v977, %v1091
    %v1093 = vpop.f32.mrb[0].mxu0
    %1094 = vmatprep.mubr.bf16.mxu0 0
    %1095 = vmatmul.mubr.bf16.gmra.mrb[0].mxu0 %v1009
    %v1096 = vpop.f32.mrb[0].mxu0
    %v1097 = vadd.f32 %v977, %v1096
    %v1098 = vpop.f32.mrb[0].mxu0
    %v1099 = vpop.f32.mrb[0].mxu0
    %v1100 = vadd.f32 %v977, %v1099
    %v1101 = vpop.f32.mrb[0].mxu0
    %1102 = vmatprep.mubr.bf16.mxu0 0
    %1103 = vmatmul.mubr.bf16.gmra.mrb[0].mxu0 %v1012
    %v1104 = vpop.f32.mrb[0].mxu0
    %v1105 = vadd.f32 %v977, %v1104
    %v1106 = vpop.f32.mrb[0].mxu0
    %v1107 = vpop.f32.mrb[0].mxu0
    %v1108 = vadd.f32 %v977, %v1107
    %v1109 = vpop.f32.mrb[0].mxu0
    %1110 = vdwg.mxu0
    %v1111 = vsub.f32 %v1049, %v25
    %v1112 = vsub.f32 %v1052, %v26
    %v1113 = vsub.f32 %v1057, %v27
    %v1114 = vsub.f32 %v1060, %v28
    %v1115 = vsub.f32 %v1065, %v29
    %v1116 = vsub.f32 %v1068, %v30
    %v1117 = vsub.f32 %v1073, %v31
    %v1118 = vsub.f32 %v1076, %v32
    %v1119 = vsub.f32 %v1081, %v33
    %v1120 = vsub.f32 %v1084, %v34
    %v1121 = vsub.f32 %v1089, %v35
    %v1122 = vsub.f32 %v1092, %v36
    %v1123 = vsub.f32 %v1097, %v37
    %v1124 = vsub.f32 %v1100, %v38
    %v1125 = vsub.f32 %v1105, %v39
    %v1126 = vsub.f32 %v1108, %v40
    %v1127 = vmul.f32 %v1111, %v1111
    %v1128 = vmul.f32 %v1112, %v1112
    %v1129 = vmul.f32 %v1113, %v1113
    %v1130 = vmul.f32 %v1114, %v1114
    %v1131 = vmul.f32 %v1115, %v1115
    %v1132 = vmul.f32 %v1116, %v1116
    %v1133 = vmul.f32 %v1117, %v1117
    %v1134 = vmul.f32 %v1118, %v1118
    %v1135 = vmul.f32 %v1119, %v1119
    %v1136 = vmul.f32 %v1120, %v1120
    %v1137 = vmul.f32 %v1121, %v1121
    %v1138 = vmul.f32 %v1122, %v1122
    %v1139 = vmul.f32 %v1123, %v1123
    %v1140 = vmul.f32 %v1124, %v1124
    %v1141 = vmul.f32 %v1125, %v1125
    %v1142 = vmul.f32 %v1126, %v1126
    %v1143 = vsel %vm55, %v1127, 0.0
    %1144 = vadd.xlane.f32.xlu0 %v1143
    %v1145 = vpop.xlane.xlu0 %1144
    %v1146 = vsel %vm55, %v1128, 0.0
    %1147 = vadd.xlane.f32.xlu0 %v1146
    %v1148 = vpop.xlane.xlu0 %1147
    %v1149 = vsel %vm55, %v1129, 0.0
    %1150 = vadd.xlane.f32.xlu0 %v1149
    %v1151 = vpop.xlane.xlu0 %1150
    %v1152 = vsel %vm55, %v1130, 0.0
    %1153 = vadd.xlane.f32.xlu0 %v1152
    %v1154 = vpop.xlane.xlu0 %1153
    %v1155 = vsel %vm55, %v1131, 0.0
    %1156 = vadd.xlane.f32.xlu0 %v1155
    %v1157 = vpop.xlane.xlu0 %1156
    %v1158 = vsel %vm55, %v1132, 0.0
    %1159 = vadd.xlane.f32.xlu0 %v1158
    %v1160 = vpop.xlane.xlu0 %1159
    %v1161 = vsel %vm55, %v1133, 0.0
    %1162 = vadd.xlane.f32.xlu0 %v1161
    %v1163 = vpop.xlane.xlu0 %1162
    %v1164 = vsel %vm55, %v1134, 0.0
    %1165 = vadd.xlane.f32.xlu0 %v1164
    %v1166 = vpop.xlane.xlu0 %1165
    %v1167 = vsel %vm55, %v1135, 0.0
    %1168 = vadd.xlane.f32.xlu0 %v1167
    %v1169 = vpop.xlane.xlu0 %1168
    %v1170 = vsel %vm55, %v1136, 0.0
    %1171 = vadd.xlane.f32.xlu0 %v1170
    %v1172 = vpop.xlane.xlu0 %1171
    %v1173 = vsel %vm55, %v1137, 0.0
    %1174 = vadd.xlane.f32.xlu0 %v1173
    %v1175 = vpop.xlane.xlu0 %1174
    %v1176 = vsel %vm55, %v1138, 0.0
    %1177 = vadd.xlane.f32.xlu0 %v1176
    %v1178 = vpop.xlane.xlu0 %1177
    %v1179 = vsel %vm55, %v1139, 0.0
    %1180 = vadd.xlane.f32.xlu0 %v1179
    %v1181 = vpop.xlane.xlu0 %1180
    %v1182 = vsel %vm55, %v1140, 0.0
    %1183 = vadd.xlane.f32.xlu0 %v1182
    %v1184 = vpop.xlane.xlu0 %1183
    %v1185 = vsel %vm55, %v1141, 0.0
    %1186 = vadd.xlane.f32.xlu0 %v1185
    %v1187 = vpop.xlane.xlu0 %1186
    %v1188 = vsel %vm55, %v1142, 0.0
    %1189 = vadd.xlane.f32.xlu0 %v1188
    %v1190 = vpop.xlane.xlu0 %1189
    %v1191 = vadd.f32 %v1145, %v1148
    %v1192 = vadd.f32 %v1191, %v1151
    %v1193 = vadd.f32 %v1192, %v1154
    %v1194 = vadd.f32 %v1193, %v1157
    %v1195 = vadd.f32 %v1194, %v1160
    %v1196 = vadd.f32 %v1195, %v1163
    %v1197 = vadd.f32 %v1196, %v1166
    %v1198 = vadd.f32 %v1197, %v1169
    %v1199 = vadd.f32 %v1198, %v1172
    %v1200 = vadd.f32 %v1199, %v1175
    %v1201 = vadd.f32 %v1200, %v1178
    %v1202 = vadd.f32 %v1201, %v1181
    %v1203 = vadd.f32 %v1202, %v1184
    %v1204 = vadd.f32 %v1203, %v1187
    %v1205 = vadd.f32 %v1204, %v1190
    %v1206 = vrot.slane %v1205, 4
    %v1207 = vadd.f32 %v1205, %v1206
    %v1208 = vrot.slane %v1207, 2
    %v1209 = vadd.f32 %v1207, %v1208
    %v1210 = vrot.slane %v1209, 1
    %v1211 = vadd.f32 %v1209, %v1210
    %v1212 = vld [vmem:[%s4] sm:$0xf]
    %v1213 = vld [vmem:[%s4 + $0x4] sm:$0xf]
    %v1214 = vld [vmem:[%s4 + $0x8] sm:$0xf]
    %v1215 = vld [vmem:[%s4 + $0xc] sm:$0xf]
    %v1216 = vld [vmem:[%s4 + $0x10] sm:$0xf]
    %v1217 = vld [vmem:[%s4 + $0x14] sm:$0xf]
    %v1218 = vld [vmem:[%s4 + $0x18] sm:$0xf]
    %v1219 = vld [vmem:[%s4 + $0x1c] sm:$0xf]
    %v1220 = vld [vmem:[%s4 + $0x20] sm:$0xf]
    %v1221 = vld [vmem:[%s4 + $0x24] sm:$0xf]
    %v1222 = vld [vmem:[%s4 + $0x28] sm:$0xf]
    %v1223 = vld [vmem:[%s4 + $0x2c] sm:$0xf]
    %v1224 = vld [vmem:[%s4 + $0x30] sm:$0xf]
    %v1225 = vld [vmem:[%s4 + $0x34] sm:$0xf]
    %v1226 = vld [vmem:[%s4 + $0x38] sm:$0xf]
    %v1227 = vld [vmem:[%s4 + $0x3c] sm:$0xf]
    %v1228 = vld [vmem:[%s4 + $0x40] sm:$0xf]
    %v1229 = vld [vmem:[%s4 + $0x44] sm:$0xf]
    %v1230 = vpack.c.bf16 %v1112, %v1111
    %v1231 = vpack.c.bf16 %v1114, %v1113
    %v1232 = vpack.c.bf16 %v1116, %v1115
    %v1233 = vpack.c.bf16 %v1118, %v1117
    %v1234 = vpack.c.bf16 %v1120, %v1119
    %v1235 = vpack.c.bf16 %v1122, %v1121
    %v1236 = vpack.c.bf16 %v1124, %v1123
    %v1237 = vpack.c.bf16 %v1126, %v1125
    %v1256 = vunpack.c.l.b16 %v1212
    %v1257 = vunpack.c.l.b16 %v1213
    %v1258 = vunpack.c.l.b16 %v1214
    %v1259 = vunpack.c.l.b16 %v1215
    %v1260 = vunpack.c.l.b16 %v1216
    %v1261 = vunpack.c.l.b16 %v1217
    %v1262 = vunpack.c.l.b16 %v1218
    %v1263 = vunpack.c.l.b16 %v1219
    %v1264 = vunpack.c.l.b16 %v1220
    %v1265 = vunpack.c.l.b16 %v1221
    %v1266 = vunpack.c.l.b16 %v1222
    %v1267 = vunpack.c.l.b16 %v1223
    %v1268 = vunpack.c.l.b16 %v1224
    %v1269 = vunpack.c.l.b16 %v1225
    %v1270 = vunpack.c.l.b16 %v1226
    %v1271 = vunpack.c.l.b16 %v1227
    %v1272 = vunpack.c.l.b16 %v1228
    %v1273 = vunpack.c.l.b16 %v1229
    %v1274 = vpack.c.b16 %v1257, %v1256
    %v1275 = vpack.c.b16 %v1259, %v1258
    %v1276 = vpack.c.b16 %v1261, %v1260
    %v1277 = vpack.c.b16 %v1263, %v1262
    %v1278 = vpack.c.b16 %v1265, %v1264
    %v1279 = vpack.c.b16 %v1267, %v1266
    %v1280 = vpack.c.b16 %v1269, %v1268
    %v1281 = vpack.c.b16 %v1271, %v1270
    %v1282 = vpack.c.b16 %v1273, %v1272
    %1292 = vmatprep.subr.bf16.mxu0 0
    %1293 = vmatpush1.bf16.msra.mxu0 %v1230
    %1294 = vmatprep.subr.bf16.mxu0 0
    %1295 = vmatpush1.bf16.msra.mxu0 %v1231
    %1296 = vmatprep.subr.bf16.mxu0 0
    %1297 = vmatpush1.bf16.msra.mxu0 %v1232
    %1298 = vmatprep.subr.bf16.mxu0 0
    %1299 = vmatpush1.bf16.msra.mxu0 %v1233
    %1300 = vmatprep.subr.bf16.mxu0 0
    %1301 = vmatpush1.bf16.msra.mxu0 %v1234
    %1302 = vmatprep.subr.bf16.mxu0 0
    %1303 = vmatpush1.bf16.msra.mxu0 %v1235
    %1304 = vmatprep.subr.bf16.mxu0 0
    %1305 = vmatpush1.bf16.msra.mxu0 %v1236
    %1306 = vmatprep.subr.bf16.mxu0 0
    %1307 = vmatpush1.bf16.msra.mxu0 %v1237
    %1308 = vmatprep.subr.bf16.mxu0 0
    %1309 = vmatpush1.bf16.msra.mxu0 0
    %1310 = vmatprep.subr.bf16.mxu0 0
    %1311 = vmatpush1.bf16.msra.mxu0 0
    %1312 = vmatprep.subr.bf16.mxu0 0
    %1313 = vmatpush1.bf16.msra.mxu0 0
    %1314 = vmatprep.subr.bf16.mxu0 0
    %1315 = vmatpush1.bf16.msra.mxu0 0
    %1316 = vmatprep.subr.bf16.mxu0 0
    %1317 = vmatpush1.bf16.msra.mxu0 0
    %1318 = vmatprep.subr.bf16.mxu0 0
    %1319 = vmatpush1.bf16.msra.mxu0 0
    %1320 = vmatprep.subr.bf16.mxu0 0
    %1321 = vmatpush1.bf16.msra.mxu0 0
    %1322 = vmatprep.subr.bf16.mxu0 0
    %1323 = vmatpush1.bf16.msra.mxu0 0
    %1324 = vmatprep.mubr.bf16.mxu0 0
    %1325 = vmatmul.mubr.bf16.gmra.mrb[0].mxu0 %v1274
    %v1326 = vpop.f32.mrb[0].mxu0
    %v1327 = vadd.f32 0.0, %v1326
    %v1328 = vpop.f32.mrb[0].mxu0
    %v1329 = vpop.f32.mrb[0].mxu0
    %v1330 = vadd.f32 0.0, %v1329
    %v1331 = vpop.f32.mrb[0].mxu0
    %1332 = vmatprep.mubr.bf16.mxu0 0
    %1333 = vmatmul.mubr.bf16.gmra.mrb[0].mxu0 %v1275
    %v1334 = vpop.f32.mrb[0].mxu0
    %v1335 = vadd.f32 0.0, %v1334
    %v1336 = vpop.f32.mrb[0].mxu0
    %v1337 = vpop.f32.mrb[0].mxu0
    %v1338 = vadd.f32 0.0, %v1337
    %v1339 = vpop.f32.mrb[0].mxu0
    %1340 = vmatprep.mubr.bf16.mxu0 0
    %1341 = vmatmul.mubr.bf16.gmra.mrb[0].mxu0 %v1276
    %v1342 = vpop.f32.mrb[0].mxu0
    %v1343 = vadd.f32 0.0, %v1342
    %v1344 = vpop.f32.mrb[0].mxu0
    %v1345 = vpop.f32.mrb[0].mxu0
    %v1346 = vadd.f32 0.0, %v1345
    %v1347 = vpop.f32.mrb[0].mxu0
    %1348 = vmatprep.mubr.bf16.mxu0 0
    %1349 = vmatmul.mubr.bf16.gmra.mrb[0].mxu0 %v1277
    %v1350 = vpop.f32.mrb[0].mxu0
    %v1351 = vadd.f32 0.0, %v1350
    %v1352 = vpop.f32.mrb[0].mxu0
    %v1353 = vpop.f32.mrb[0].mxu0
    %v1354 = vadd.f32 0.0, %v1353
    %v1355 = vpop.f32.mrb[0].mxu0
    %1356 = vmatprep.mubr.bf16.mxu0 0
    %1357 = vmatmul.mubr.bf16.gmra.mrb[0].mxu0 %v1278
    %v1358 = vpop.f32.mrb[0].mxu0
    %v1359 = vadd.f32 0.0, %v1358
    %v1360 = vpop.f32.mrb[0].mxu0
    %v1361 = vpop.f32.mrb[0].mxu0
    %v1362 = vadd.f32 0.0, %v1361
    %v1363 = vpop.f32.mrb[0].mxu0
    %1364 = vmatprep.mubr.bf16.mxu0 0
    %1365 = vmatmul.mubr.bf16.gmra.mrb[0].mxu0 %v1279
    %v1366 = vpop.f32.mrb[0].mxu0
    %v1367 = vadd.f32 0.0, %v1366
    %v1368 = vpop.f32.mrb[0].mxu0
    %v1369 = vpop.f32.mrb[0].mxu0
    %v1370 = vadd.f32 0.0, %v1369
    %v1371 = vpop.f32.mrb[0].mxu0
    %1372 = vmatprep.mubr.bf16.mxu0 0
    %1373 = vmatmul.mubr.bf16.gmra.mrb[0].mxu0 %v1280
    %v1374 = vpop.f32.mrb[0].mxu0
    %v1375 = vadd.f32 0.0, %v1374
    %v1376 = vpop.f32.mrb[0].mxu0
    %v1377 = vpop.f32.mrb[0].mxu0
    %v1378 = vadd.f32 0.0, %v1377
    %v1379 = vpop.f32.mrb[0].mxu0
    %1380 = vmatprep.mubr.bf16.mxu0 0
    %1381 = vmatmul.mubr.bf16.gmra.mrb[0].mxu0 %v1281
    %v1382 = vpop.f32.mrb[0].mxu0
    %v1383 = vadd.f32 0.0, %v1382
    %v1384 = vpop.f32.mrb[0].mxu0
    %v1385 = vpop.f32.mrb[0].mxu0
    %v1386 = vadd.f32 0.0, %v1385
    %v1387 = vpop.f32.mrb[0].mxu0
    %1388 = vmatprep.mubr.bf16.mxu0 0
    %1389 = vmatmul.mubr.bf16.gmra.mrb[0].mxu0 %v1282
    %v1390 = vpop.f32.mrb[0].mxu0
    %v1391 = vadd.f32 0.0, %v1390
    %v1392 = vpop.f32.mrb[0].mxu0
    %v1393 = vpop.f32.mrb[0].mxu0
    %v1394 = vadd.f32 0.0, %v1393
    %v1395 = vpop.f32.mrb[0].mxu0
    %1396 = vdwg.mxu0
    %v1397 = vmul.f32 %v1327, %v1327
    %v1398 = vmul.f32 %v1330, %v1330
    %v1399 = vmul.f32 %v1335, %v1335
    %v1400 = vmul.f32 %v1338, %v1338
    %v1401 = vmul.f32 %v1343, %v1343
    %v1402 = vmul.f32 %v1346, %v1346
    %v1403 = vmul.f32 %v1351, %v1351
    %v1404 = vmul.f32 %v1354, %v1354
    %v1405 = vmul.f32 %v1359, %v1359
    %v1406 = vmul.f32 %v1362, %v1362
    %v1407 = vmul.f32 %v1367, %v1367
    %v1408 = vmul.f32 %v1370, %v1370
    %v1409 = vmul.f32 %v1375, %v1375
    %v1410 = vmul.f32 %v1378, %v1378
    %v1411 = vmul.f32 %v1383, %v1383
    %v1412 = vmul.f32 %v1386, %v1386
    %v1413 = vmul.f32 %v1391, %v1391
    %v1414 = vmul.f32 %v1394, %v1394
    %v1415 = vadd.f32 %v1397, %v1406
    %v1416 = vadd.f32 %v1398, %v1407
    %v1417 = vadd.f32 %v1399, %v1408
    %v1418 = vadd.f32 %v1400, %v1409
    %v1419 = vadd.f32 %v1401, %v1410
    %v1420 = vadd.f32 %v1402, %v1411
    %v1421 = vadd.f32 %v1403, %v1412
    %v1422 = vadd.f32 %v1404, %v1413
    %v1423 = vadd.f32 %v1405, %v1414
    %v1424 = vrsqrt.pop %v1415
    %v1425 = vmul.f32 %v1415, %v1424
    %vm1426 = vcmp.eq.f32.partialorder %v1415, inf
    %v1427 = vsel %vm1426, %v1415, %v1425
    %vm1428 = vcmp.eq.f32.partialorder %v1415, 0.0
    %v1429 = vand.u32 %v1415, 2147483648
    %v1430 = vsel %vm1428, %v1429, %v1427
    %v1431 = vrsqrt.pop %v1416
    %v1432 = vmul.f32 %v1416, %v1431
    %vm1433 = vcmp.eq.f32.partialorder %v1416, inf
    %v1434 = vsel %vm1433, %v1416, %v1432
    %vm1435 = vcmp.eq.f32.partialorder %v1416, 0.0
    %v1436 = vand.u32 %v1416, 2147483648
    %v1437 = vsel %vm1435, %v1436, %v1434
    %v1438 = vrsqrt.pop %v1417
    %v1439 = vmul.f32 %v1417, %v1438
    %vm1440 = vcmp.eq.f32.partialorder %v1417, inf
    %v1441 = vsel %vm1440, %v1417, %v1439
    %vm1442 = vcmp.eq.f32.partialorder %v1417, 0.0
    %v1443 = vand.u32 %v1417, 2147483648
    %v1444 = vsel %vm1442, %v1443, %v1441
    %v1445 = vrsqrt.pop %v1418
    %v1446 = vmul.f32 %v1418, %v1445
    %vm1447 = vcmp.eq.f32.partialorder %v1418, inf
    %v1448 = vsel %vm1447, %v1418, %v1446
    %vm1449 = vcmp.eq.f32.partialorder %v1418, 0.0
    %v1450 = vand.u32 %v1418, 2147483648
    %v1451 = vsel %vm1449, %v1450, %v1448
    %v1452 = vrsqrt.pop %v1419
    %v1453 = vmul.f32 %v1419, %v1452
    %vm1454 = vcmp.eq.f32.partialorder %v1419, inf
    %v1455 = vsel %vm1454, %v1419, %v1453
    %vm1456 = vcmp.eq.f32.partialorder %v1419, 0.0
    %v1457 = vand.u32 %v1419, 2147483648
    %v1458 = vsel %vm1456, %v1457, %v1455
    %v1459 = vrsqrt.pop %v1420
    %v1460 = vmul.f32 %v1420, %v1459
    %vm1461 = vcmp.eq.f32.partialorder %v1420, inf
    %v1462 = vsel %vm1461, %v1420, %v1460
    %vm1463 = vcmp.eq.f32.partialorder %v1420, 0.0
    %v1464 = vand.u32 %v1420, 2147483648
    %v1465 = vsel %vm1463, %v1464, %v1462
    %v1466 = vrsqrt.pop %v1421
    %v1467 = vmul.f32 %v1421, %v1466
    %vm1468 = vcmp.eq.f32.partialorder %v1421, inf
    %v1469 = vsel %vm1468, %v1421, %v1467
    %vm1470 = vcmp.eq.f32.partialorder %v1421, 0.0
    %v1471 = vand.u32 %v1421, 2147483648
    %v1472 = vsel %vm1470, %v1471, %v1469
    %v1473 = vrsqrt.pop %v1422
    %v1474 = vmul.f32 %v1422, %v1473
    %vm1475 = vcmp.eq.f32.partialorder %v1422, inf
    %v1476 = vsel %vm1475, %v1422, %v1474
    %vm1477 = vcmp.eq.f32.partialorder %v1422, 0.0
    %v1478 = vand.u32 %v1422, 2147483648
    %v1479 = vsel %vm1477, %v1478, %v1476
    %v1480 = vrsqrt.pop %v1423
    %v1481 = vmul.f32 %v1423, %v1480
    %vm1482 = vcmp.eq.f32.partialorder %v1423, inf
    %v1483 = vsel %vm1482, %v1423, %v1481
    %vm1484 = vcmp.eq.f32.partialorder %v1423, 0.0
    %v1485 = vand.u32 %v1423, 2147483648
    %v1486 = vsel %vm1484, %v1485, %v1483
    %v1487 = vsel %vm55, %v1430, 0.0
    %1488 = vadd.xlane.f32.xlu0 %v1487
    %v1489 = vpop.xlane.xlu0 %1488
    %v1490 = vsel %vm55, %v1437, 0.0
    %1491 = vadd.xlane.f32.xlu0 %v1490
    %v1492 = vpop.xlane.xlu0 %1491
    %v1493 = vsel %vm55, %v1444, 0.0
    %1494 = vadd.xlane.f32.xlu0 %v1493
    %v1495 = vpop.xlane.xlu0 %1494
    %v1496 = vsel %vm55, %v1451, 0.0
    %1497 = vadd.xlane.f32.xlu0 %v1496
    %v1498 = vpop.xlane.xlu0 %1497
    %v1499 = vsel %vm55, %v1458, 0.0
    %1500 = vadd.xlane.f32.xlu0 %v1499
    %v1501 = vpop.xlane.xlu0 %1500
    %v1502 = vsel %vm55, %v1465, 0.0
    %1503 = vadd.xlane.f32.xlu0 %v1502
    %v1504 = vpop.xlane.xlu0 %1503
    %v1505 = vsel %vm55, %v1472, 0.0
    %1506 = vadd.xlane.f32.xlu0 %v1505
    %v1507 = vpop.xlane.xlu0 %1506
    %v1508 = vsel %vm55, %v1479, 0.0
    %1509 = vadd.xlane.f32.xlu0 %v1508
    %v1510 = vpop.xlane.xlu0 %1509
    %v1511 = vsel %vm55, %v1486, 0.0
    %1512 = vadd.xlane.f32.xlu0 %v1511
    %v1513 = vpop.xlane.xlu0 %1512
    %v1514 = vadd.f32 %v1489, %v1492
    %v1515 = vadd.f32 %v1514, %v1495
    %v1516 = vadd.f32 %v1515, %v1498
    %v1517 = vadd.f32 %v1516, %v1501
    %v1518 = vadd.f32 %v1517, %v1504
    %v1519 = vadd.f32 %v1518, %v1507
    %v1520 = vadd.f32 %v1519, %v1510
    %v1521 = vadd.f32 %v1520, %v1513
    %v1522 = vrot.slane %v1521, 4
    %v1523 = vadd.f32 %v1521, %v1522
    %v1524 = vrot.slane %v1523, 2
    %v1525 = vadd.f32 %v1523, %v1524
    %v1526 = vrot.slane %v1525, 1
    %v1527 = vadd.f32 %v1525, %v1526
    %v1528 = vlaneseq
    %v1529 = vshrl.u32 %v1528, 7
    %vm1530 = vcmp.eq.s32.totalorder %v1529, 0
    %vm1531 = vcmp.eq.s32.totalorder %v537, 0
    %vm1532 = vmand %vm1530, %vm1531
    %vm1533 = vcmp.eq.s32.totalorder %v537, 1
    %vm1534 = vmand %vm1530, %vm1533
    %vm1535 = vcmp.eq.s32.totalorder %v537, 2
    %vm1536 = vmand %vm1530, %vm1535
    %v1537 = vsel %vm1536, %v961, 0.0
    %v1538 = vsel %vm1534, %v1527, %v1537
    %v1539 = vsel %vm1532, %v1211, %v1538
    %1540 = vst [vmem:[#allocation2] sm:$0xff] %v1539
    // Predicated region
    $region26: #{tpu_custom_call.1} parent=1 // pred_check
      _
    $region27: #{tpu_custom_call.1} parent=1 // pred_check_branch
      %1542 = sbr.rel (0) target = $region29
    $region28: #{tpu_custom_call.1} parent=1 // pred_region
      %s1544 = ssub.s32 128, 128
      %1545 = vsyncadd [#allocation3], %s1544
      %s1547 = sshll.u32 [#allocation2], 4
      %s1548 = int_to_ptr.vmem [resolvable:$true] %s1547
      %1550 = dma.vmem_to_hbm [thread:$0]  %s1548, 128, %s6, [#allocation3]
    $region29: #{tpu_custom_call.1} parent=1 // pred_fallthru
      _
    // Predicated region
    $region30: #{tpu_custom_call.1} parent=1 // pred_check
      _
    $region31: #{tpu_custom_call.1} parent=1 // pred_check_branch
      %1552 = sbr.rel (0) target = $region33
    $region32: #{tpu_custom_call.1} parent=1 // pred_region
      %1553 = dma.done [#allocation3], 128
    $region33: #{tpu_custom_call.1} parent=1 // pred_fallthru
      _
    %1554 = vsyncpa [#allocation3], 1

</llo_original>
